<compile_context>
chip_gen: v6e
topology: v6e:2x2x1
jax: 0.10.0
libtpu: 0.0.40
codegen_flags: <defaults>
</compile_context>

<pallas_src>
import numpy as np

import jax
import jax.numpy as jnp
from jax.experimental import pallas as pl
from jax.experimental.pallas import tpu as pltpu

IN_FEATURES = 943
OUT_FEATURES = 4760


def _round_up(x, m):
    return (x + m - 1) // m * m


# ---------------------------------------------------------------------------
# Kernel
# ---------------------------------------------------------------------------
def _fused_body(x_ref, w1_ref, b1_ref, mask_ref, w2_ref, b2_ref, o_ref):
    """out_tile = dropout(tanh(x @ W1 + b1)) @ W2_tile + b2_tile (f32 accum)."""
    h = jnp.tanh(
        jnp.dot(x_ref[...], w1_ref[...], preferred_element_type=jnp.float32)
        + b1_ref[...]
    )
    if mask_ref is not None:              # static Python branch (training mode)
        h = h * mask_ref[...]             # pre-scaled keep mask (1/(1-p) or 0)
    h = h.astype(w2_ref.dtype)            # bf16 h halves vregs feeding the MXU
    o_ref[...] = (
        jnp.dot(h, w2_ref[...], preferred_element_type=jnp.float32)
        + b2_ref[...]
    ).astype(o_ref.dtype)


def _kernel_eval(x_ref, w1_ref, b1_ref, w2_ref, b2_ref, o_ref):
    _fused_body(x_ref, w1_ref, b1_ref, None, w2_ref, b2_ref, o_ref)


def _kernel_dropout(x_ref, w1_ref, b1_ref, mask_ref, w2_ref, b2_ref, o_ref):
    _fused_body(x_ref, w1_ref, b1_ref, mask_ref, w2_ref, b2_ref, o_ref)


# ---------------------------------------------------------------------------
# Tiling / parameter preparation (one-time)
# ---------------------------------------------------------------------------
_TILE_BUDGET_BYTES = 16 * 1024 * 1024   # VMEM budget for the streamed W2/out tiles
_ASSUMED_BP = 256                       # conservative batch bound for budgeting


def _choose_tile_n(n_total, hp, w_bytes):
    """Largest lane-dense (x128) W2 column tile that fits the VMEM budget."""
    n128 = _round_up(n_total, 128)
    # double-buffered: W2 column (bf16) + b2 column (f32) + output column (f32)
    per_col = 2 * (hp * w_bytes + 4 + _ASSUMED_BP * 4)
    max_tile = max(128, (_TILE_BUDGET_BYTES // per_col) // 128 * 128)
    if max_tile >= n128:
        # Whole fc2 fits comfortably: still split into 2 tiles so the grid has a
        # "parallel" axis for v7x megacore; 2 steps of overhead is negligible.
        return max(128, _round_up(-(-n128 // 2), 128))
    return min(max_tile, n128)


def prepare_params(params, *, weight_dtype=jnp.bfloat16):
    """One-time padding / bf16 cast of the weights (do NOT redo per forward)."""
    w1 = jnp.asarray(params["w1"])
    b1 = jnp.asarray(params["b1"])
    w2 = jnp.asarray(params["w2"])
    b2 = jnp.asarray(params["b2"])
    k, h = w1.shape
    n = w2.shape[1]
    assert k == IN_FEATURES and w2.shape[0] == h and n == OUT_FEATURES

    kp = _round_up(k, 128)
    hp = _round_up(h, 128)  # NOTE: pick hidden_units as a multiple of 256 on
                            # v6e/v7x to fill the 256-wide MXU.
    w_bytes = np.dtype(weight_dtype).itemsize
    tile_n = _choose_tile_n(n, hp, w_bytes)
    np_ = _round_up(n, tile_n)

    w1_p = jnp.zeros((kp, hp), weight_dtype).at[:k, :h].set(w1.astype(weight_dtype))
    b1_p = jnp.zeros((1, hp), jnp.float32).at[:, :h].set(
        b1.astype(jnp.float32)[None, :])
    w2_p = jnp.zeros((hp, np_), weight_dtype).at[:h, :n].set(w2.astype(weight_dtype))
    b2_p = jnp.zeros((1, np_), jnp.float32).at[:, :n].set(
        b2.astype(jnp.float32)[None, :])

    return {
        "w1": w1_p, "b1": b1_p, "w2": w2_p, "b2": b2_p,
        "hidden": int(h), "tile_n": int(tile_n), "weight_dtype": weight_dtype,
    }


def dropout_mask(key, shape, rate):
    """Scaled keep-mask matching torch.nn.Dropout(p=rate) training semantics."""
    rate = float(rate)
    if rate <= 0.0:
        return jnp.ones(shape, jnp.float32)
    if rate >= 1.0:
        return jnp.zeros(shape, jnp.float32)
    keep_prob = 1.0 - rate
    keep = jax.random.bernoulli(key, p=keep_prob, shape=shape)
    return keep.astype(jnp.float32) * (1.0 / keep_prob)


# ---------------------------------------------------------------------------
# Forward pass
# ---------------------------------------------------------------------------
def network_forward(x, prepped, *, dropout_rate=0.0, training=False, rng_key=None):
    """x: (B, 943) float32 -> (B, 4760) float32."""
    w1_p, b1_p, w2_p, b2_p = prepped["w1"], prepped["b1"], prepped["w2"], prepped["b2"]
    h_true = prepped["hidden"]
    tile_n = prepped["tile_n"]
    wdt = prepped["weight_dtype"]

    b, k = x.shape
    assert k == IN_FEATURES
    kp, hp = w1_p.shape
    np_ = w2_p.shape[1]
    bp = _round_up(max(b, 1), 8)
    num_tiles = np_ // tile_n
    w_bytes = np.dtype(wdt).itemsize

    # Only the tiny activation is padded per call.
    x_p = jnp.zeros((bp, kp), wdt).at[:b, :k].set(x.astype(wdt))

    apply_dropout = bool(training) and float(dropout_rate) > 0.0
    inputs = [x_p, w1_p, b1_p]
    in_specs = [
        pl.BlockSpec((bp, kp), lambda j: (0, 0)),    # x  (resident)
        pl.BlockSpec((kp, hp), lambda j: (0, 0)),    # W1 (resident)
        pl.BlockSpec((1, hp), lambda j: (0, 0)),     # b1 (resident)
    ]
    if apply_dropout:
        if rng_key is None:
            raise ValueError("training-mode dropout needs rng_key "
                             "(vary it per training step)")
        mask = dropout_mask(rng_key, (b, h_true), dropout_rate)
        mask_p = jnp.ones((bp, hp), jnp.float32).at[:b, :h_true].set(mask)
        inputs.append(mask_p)
        in_specs.append(pl.BlockSpec((bp, hp), lambda j: (0, 0)))  # mask (resident)
        kernel = _kernel_dropout
    else:
        kernel = _kernel_eval
    inputs += [w2_p, b2_p]
    in_specs += [
        pl.BlockSpec((hp, tile_n), lambda j: (0, j)),   # W2 column tile
        pl.BlockSpec((1, tile_n), lambda j: (0, j)),    # b2 tile
    ]

    # VMEM footprint estimate (inputs/output double-buffered by the pipeline).
    resident = (x_p.size * x_p.dtype.itemsize + w1_p.size * w1_p.dtype.itemsize
                + b1_p.size * 4 + (bp * hp * 4 if apply_dropout else 0))
    per_step = hp * tile_n * w_bytes + tile_n * 4 + bp * tile_n * 4
    est_vmem = 2 * (resident + per_step) + (2 << 20)
    # >=32 MiB keeps large tiles alive on v5e's 16 MiB default scoped limit;
    # <=64 MiB stays inside v7x physical VMEM.
    # TODO(synk): pl.Buffered(1) on the resident inputs would halve their
    # footprint for very large hidden_units on v7x.
    vmem_limit = int(min(max(est_vmem, 32 * 1024 * 1024), 64 * 1024 * 1024))

    extra = {}
    if hasattr(pl, "CostEstimate"):
        flops = 2 * bp * kp * hp * num_tiles + 2 * bp * hp * np_
        bytes_accessed = (
            x_p.size * x_p.dtype.itemsize + w1_p.size * w1_p.dtype.itemsize
            + w2_p.size * w2_p.dtype.itemsize + b1_p.size * 4 + b2_p.size * 4
            + bp * np_ * 4 + (bp * hp * 4 if apply_dropout else 0))
        extra["cost_estimate"] = pl.CostEstimate(
            flops=flops, transcendentals=bp * hp * num_tiles,
            bytes_accessed=bytes_accessed)

    out_p = pl.pallas_call(
        kernel,
        out_shape=jax.ShapeDtypeStruct((bp, np_), jnp.float32),
        grid=(num_tiles,),
        in_specs=in_specs,
        out_specs=pl.BlockSpec((bp, tile_n), lambda j: (0, j)),
        compiler_params=pltpu.CompilerParams(
            dimension_semantics=("parallel",),  # h recomputed per tile: no carry
            vmem_limit_bytes=vmem_limit,
        ),
        **extra,
    )(*inputs)

    return out_p[:b, :OUT_FEATURES]


# ---------------------------------------------------------------------------
# Parameter init (matches nn.Linear's U(-1/sqrt(fan_in), 1/sqrt(fan_in)))
# ---------------------------------------------------------------------------
def init_params(key, hidden_units):
    k1, k2, k3, k4 = jax.random.split(key, 4)
    bound1 = 1.0 / jnp.sqrt(jnp.float32(IN_FEATURES))
    bound2 = 1.0 / jnp.sqrt(jnp.float32(hidden_units))
    return {
        "w1": jax.random.uniform(k1, (IN_FEATURES, hidden_units), jnp.float32,
                                 -bound1, bound1),
        "b1": jax.random.uniform(k2, (hidden_units,), jnp.float32, -bound1, bound1),
        "w2": jax.random.uniform(k3, (hidden_units, OUT_FEATURES), jnp.float32,
                                 -bound2, bound2),
        "b2": jax.random.uniform(k4, (OUT_FEATURES,), jnp.float32, -bound2, bound2),
    }


if __name__ == "__main__":
    hidden_units = 128
    dropout_rate = 0.1   # stands in for float(sys.argv[2])
    batch = 8

    key = jax.random.PRNGKey(0)
    pkey, xkey, dkey = jax.random.split(key, 3)
    params = init_params(pkey, hidden_units)
    x = jax.random.normal(xkey, (batch, IN_FEATURES), jnp.float32)

    prepped = prepare_params(params)   # one-time pad + bf16 cast

    # --- eval mode (dropout is identity), matches PyTorch model.eval() ------
    out = network_forward(x, prepped, dropout_rate=dropout_rate, training=False)
    out = jax.block_until_ready(out)
    assert out.shape == (batch, OUT_FEATURES)

    # Pure-JAX reference using the same bf16 weights / bf16 MXU inputs.
    xb = x.astype(jnp.bfloat16)
    w1b = params["w1"].astype(jnp.bfloat16)
    w2b = params["w2"].astype(jnp.bfloat16)
    h_ref = jnp.tanh(
        jnp.dot(xb, w1b, preferred_element_type=jnp.float32) + params["b1"])
    ref = jnp.dot(h_ref.astype(jnp.bfloat16), w2b,
                  preferred_element_type=jnp.float32) + params["b2"]
    assert jnp.allclose(out, ref, atol=5e-3, rtol=5e-3), \
        float(jnp.max(jnp.abs(out - ref)))

    # --- training mode: host-generated scaled dropout mask ------------------
    out_train = network_forward(x, prepped, dropout_rate=dropout_rate,
                                training=True, rng_key=dkey)
    out_train = jax.block_until_ready(out_train)
    mask = dropout_mask(dkey, (batch, hidden_units), dropout_rate)
    ref_train = jnp.dot((h_ref * mask).astype(jnp.bfloat16), w2b,
                        preferred_element_type=jnp.float32) + params["b2"]
    assert out_train.shape == (batch, OUT_FEATURES)
    assert jnp.allclose(out_train, ref_train, atol=5e-3, rtol=5e-3), \
        float(jnp.max(jnp.abs(out_train - ref_train)))

    print("KERNEL_OK")
</pallas_src>

<mosaic_0001>
module attributes {stable_mosaic.version = 11 : i64} {
  func.func @_kernel_eval(%arg0: i32, %arg1: memref<8x1024xbf16, #tpu.memory_space<vmem>>, %arg2: memref<1024x128xbf16, #tpu.memory_space<vmem>>, %arg3: memref<1x128xf32, #tpu.memory_space<vmem>>, %arg4: memref<128x2432xbf16, #tpu.memory_space<vmem>>, %arg5: memref<1x2432xf32, #tpu.memory_space<vmem>>, %arg6: memref<8x2432xf32, #tpu.memory_space<vmem>>) attributes {dimension_semantics = [#tpu.dimension_semantics<parallel>], iteration_bounds = array<i64: 2>, scalar_prefetch = 0 : i64, scratch_operands = 0 : i64, tpu.core_type = #tpu.core_type<tc>, window_params = [{pipeline_mode = #tpu.pipeline_mode<synchronous>, transform_indices = @transform_0, window_bounds = array<i64: 8, 1024>}, {pipeline_mode = #tpu.pipeline_mode<synchronous>, transform_indices = @transform_1, window_bounds = array<i64: 1024, 128>}, {pipeline_mode = #tpu.pipeline_mode<synchronous>, transform_indices = @transform_2, window_bounds = array<i64: 1, 128>}, {transform_indices = @transform_3, window_bounds = array<i64: 128, 2432>}, {transform_indices = @transform_4, window_bounds = array<i64: 1, 2432>}, {transform_indices = @transform_5, window_bounds = array<i64: 8, 2432>}]} {
    %c0 = arith.constant 0 : index
    %c0_0 = arith.constant 0 : index
    %0 = vector.load %arg1[%c0, %c0_0] : memref<8x1024xbf16, #tpu.memory_space<vmem>>, vector<8x1024xbf16>
    %c0_1 = arith.constant 0 : index
    %c0_2 = arith.constant 0 : index
    %1 = vector.load %arg2[%c0_1, %c0_2] : memref<1024x128xbf16, #tpu.memory_space<vmem>>, vector<1024x128xbf16>
    %cst = arith.constant dense<0.000000e+00> : vector<8x128xf32>
    %2 = tpu.matmul %0, %1, %cst {dimension_numbers = #tpu.dot_dimension_numbers<[1], [0], [0], [1], [0, 0, 1, 1], [], []>} : vector<8x1024xbf16>, vector<1024x128xbf16>, vector<8x128xf32> -> vector<8x128xf32>
    %c0_3 = arith.constant 0 : index
    %c0_4 = arith.constant 0 : index
    %3 = vector.load %arg3[%c0_3, %c0_4] : memref<1x128xf32, #tpu.memory_space<vmem>>, vector<1x128xf32>
    %4 = vector.broadcast %3 : vector<1x128xf32> to vector<8x128xf32>
    %5 = arith.addf %2, %4 : vector<8x128xf32>
    %6 = math.tanh %5 : vector<8x128xf32>
    %7 = arith.truncf %6 : vector<8x128xf32> to vector<8x128xbf16>
    %c0_5 = arith.constant 0 : index
    %c0_6 = arith.constant 0 : index
    %8 = vector.load %arg4[%c0_5, %c0_6] : memref<128x2432xbf16, #tpu.memory_space<vmem>>, vector<128x2432xbf16>
    %cst_7 = arith.constant dense<0.000000e+00> : vector<8x2432xf32>
    %9 = tpu.matmul %7, %8, %cst_7 {dimension_numbers = #tpu.dot_dimension_numbers<[1], [0], [0], [1], [0, 0, 1, 1], [], []>} : vector<8x128xbf16>, vector<128x2432xbf16>, vector<8x2432xf32> -> vector<8x2432xf32>
    %c0_8 = arith.constant 0 : index
    %c0_9 = arith.constant 0 : index
    %10 = vector.load %arg5[%c0_8, %c0_9] : memref<1x2432xf32, #tpu.memory_space<vmem>>, vector<1x2432xf32>
    %11 = vector.broadcast %10 : vector<1x2432xf32> to vector<8x2432xf32>
    %12 = arith.addf %9, %11 : vector<8x2432xf32>
    %c0_10 = arith.constant 0 : index
    %c0_11 = arith.constant 0 : index
    %13 = vector.load %arg6[%c0_10, %c0_11] : memref<8x2432xf32, #tpu.memory_space<vmem>>, vector<8x2432xf32>
    tpu.vector_store %arg6[%c0_10, %c0_11], %12 {strides = array<i32>} : memref<8x2432xf32, #tpu.memory_space<vmem>>, vector<8x2432xf32>,
    return
  }
  func.func @transform_0(%arg0: i32) -> (i32, i32) {
    %c0_i32 = arith.constant 0 : i32
    %c0_i32_0 = arith.constant 0 : i32
    %c0_i32_1 = arith.constant 0 : i32
    return %c0_i32, %c0_i32_0 : i32, i32
  }
  func.func @transform_1(%arg0: i32) -> (i32, i32) {
    %c0_i32 = arith.constant 0 : i32
    %c0_i32_0 = arith.constant 0 : i32
    %c0_i32_1 = arith.constant 0 : i32
    return %c0_i32, %c0_i32_0 : i32, i32
  }
  func.func @transform_2(%arg0: i32) -> (i32, i32) {
    %c0_i32 = arith.constant 0 : i32
    %c0_i32_0 = arith.constant 0 : i32
    %c0_i32_1 = arith.constant 0 : i32
    return %c0_i32, %c0_i32_0 : i32, i32
  }
  func.func @transform_3(%arg0: i32) -> (i32, i32) {
    %c0_i32 = arith.constant 0 : i32
    %c0_i32_0 = arith.constant 0 : i32
    return %c0_i32, %arg0 : i32, i32
  }
  func.func @transform_4(%arg0: i32) -> (i32, i32) {
    %c0_i32 = arith.constant 0 : i32
    %c0_i32_0 = arith.constant 0 : i32
    return %c0_i32, %arg0 : i32, i32
  }
  func.func @transform_5(%arg0: i32) -> (i32, i32) {
    %c0_i32 = arith.constant 0 : i32
    %c0_i32_0 = arith.constant 0 : i32
    return %c0_i32, %arg0 : i32, i32
  }
}

</mosaic_0001>

<llo_original>
// kernel: tpu_custom_call.1
$region0: #{tpu_custom_call.1}
  #allocation0 [shape = 'u32[]', space=smem, size = 0x4, offset = 0x4, fixed_abs, tag = 'smem constant byte address 0x4 - core index']
  #allocation1 [shape = 'u32[144,128]{1,0:T(1,128)}', space=vmem, size = 0x12000, scoped, tag = 'internal scratch']
  %s0 = inlined_call_operand.hbm [shape: bf16[8,1024], index: 0, kind: input, shape index: {}]
  %s1 = inlined_call_operand.hbm [shape: bf16[1024,128], index: 1, kind: input, shape index: {}]
  %s2 = inlined_call_operand.hbm [shape: f32[1,128], index: 2, kind: input, shape index: {}]
  %s3 = inlined_call_operand.hbm [shape: bf16[128,4864], index: 3, kind: input, shape index: {}]
  %s4 = inlined_call_operand.hbm [shape: f32[1,4864], index: 4, kind: input, shape index: {}]
  %s5 = inlined_call_operand.hbm [shape: f32[8,4864], index: 5, kind: output, shape index: {}]
  %s6 = sld [smem:[#allocation0]]
  $region73: #{tpu_custom_call.1} parent=0
    _
  %s8 = ssub.s32 1, %s6
  %s9 = scalar_select 0, %s8, %s6
  $region1: #{tpu_custom_call.1} parent=0
    #allocation2 [shape = 'u8[16384]{0}', space=vmem, size = 0x4000, scoped, tag = 'input window, operand 0, single buffered']
    #allocation3 [shape = 's32[2]{0}', space=sflag, size = 0x8, scoped, tag = 'scoped memory for tpu_custom_call.1']
    #allocation4 [shape = 's32[2]{0}', space=sflag, size = 0x8, scoped, tag = 'scoped memory for tpu_custom_call.1']
    #allocation5 [shape = 'u8[262144]{0}', space=vmem, size = 0x40000, scoped, tag = 'input window, operand 1, single buffered']
    #allocation6 [shape = 's32[1]{0}', space=sflag, size = 0x4, scoped, tag = 'scoped memory for tpu_custom_call.1']
    #allocation7 [shape = 'u8[512]{0}', space=vmem, size = 0x400, scoped, tag = 'input window, operand 2, single buffered']
    #allocation8 [shape = 'u8[1245184]{0}', space=vmem, size = 0x130000, scoped, tag = 'input window, operand 3']
    #allocation9 [shape = 's32[2]{0}', space=sflag, size = 0x8, scoped, tag = 'scoped memory for tpu_custom_call.1']
    #allocation10 [shape = 'u8[19456]{0}', space=vmem, size = 0x4c00, scoped, tag = 'input window, operand 4']
    #allocation11 [shape = 'u8[155648]{0}', space=vmem, size = 0x26000, scoped, tag = 'output window, operand 0']
    %10 = vsyncpa [#allocation3], 0
    %11 = vsyncpa [#allocation6], 0
    %12 = vsyncpa [#allocation9], 0
    %s13 = scalar_lea.sflag [#allocation9], 1
    %14 = vsyncpa %s13, 0
    %15 = vsyncpa [#allocation4], 0
    %s16 = scalar_lea.sflag [#allocation4], 1
    %17 = vsyncpa %s16, 0
    loop: start=0, step=1, limit=4
    $region2: #{tpu_custom_call.1} parent=1 // loop_pre_header
      _
    $region3: #{tpu_custom_call.1} parent=1 // loop_header
      %s19 = sphi 0, %s23
      %p20 = scmp.ge.s32.totalorder %s19, 4
      %s27 = sphi 0, %s27
      %s29 = sphi 0, %s27
      %s30 = sphi 0, %s29
      %s44 = sphi 0, %s30
      %s48 = sphi 0, %s48
      %s50 = sphi 0, %s48
      %s51 = sphi 0, %s50
      %s65 = sphi 0, %s51
      %s69 = sphi 0, %s69
      %s71 = sphi 0, %s69
      %s72 = sphi 0, %s71
      %s86 = sphi 0, %s72
      %s92 = sphi 0, %s94
      %s95 = sphi 0, %s92
      %s96 = sphi 0, %s95
      %s112 = sphi 0, %s96
      %s118 = sphi 0, %s120
      %s121 = sphi 0, %s118
      %s122 = sphi 0, %s121
      %s138 = sphi 0, %s122
      %s144 = sphi 0, %s146
      %s147 = sphi 0, %s144
      %s148 = sphi 0, %s147
      %s164 = sphi 0, %s148
    $region4: #{tpu_custom_call.1} parent=1 // loop_header_branch
      %22 = sbr.rel (%p20) target = $region8
    $region5: #{tpu_custom_call.1} parent=1 // loop_body
      %s24 = ssub.s32 %s19, 1
      %s25 = ssub.s32 %s19, 2
      %s26 = sadd.s32 %s19, 1
      %s28 = sadd.s32 %s27, 1
      %p31 = scmp.eq.s32.totalorder %s19, 1
      %p32 = scmp.ne.s32.totalorder %s27, %s29
      %p33 = scmp.eq.s32.totalorder %s19, 0
      %p34 = por %p32, %p33
      %p35 = scmp.ne.s32.totalorder %s27, %s29
      %p36 = scmp.eq.s32.totalorder %s24, 1
      %p37 = por %p35, %p36
      %p38 = scmp.ne.s32.totalorder %s29, %s30
      %p39 = scmp.eq.s32.totalorder %s24, 0
      %p40 = por %p38, %p39
      %p41 = scmp.ne.s32.totalorder %s29, %s30
      %p42 = scmp.eq.s32.totalorder %s25, 1
      %p43 = por %p41, %p42
      %p45 = scmp.ne.s32.totalorder %s30, %s44
      %p46 = scmp.eq.s32.totalorder %s25, 0
      %p47 = por %p45, %p46
      %s49 = sadd.s32 %s48, 1
      %p52 = scmp.eq.s32.totalorder %s19, 1
      %p53 = scmp.ne.s32.totalorder %s48, %s50
      %p54 = scmp.eq.s32.totalorder %s19, 0
      %p55 = por %p53, %p54
      %p56 = scmp.ne.s32.totalorder %s48, %s50
      %p57 = scmp.eq.s32.totalorder %s24, 1
      %p58 = por %p56, %p57
      %p59 = scmp.ne.s32.totalorder %s50, %s51
      %p60 = scmp.eq.s32.totalorder %s24, 0
      %p61 = por %p59, %p60
      %p62 = scmp.ne.s32.totalorder %s50, %s51
      %p63 = scmp.eq.s32.totalorder %s25, 1
      %p64 = por %p62, %p63
      %p66 = scmp.ne.s32.totalorder %s51, %s65
      %p67 = scmp.eq.s32.totalorder %s25, 0
      %p68 = por %p66, %p67
      %s70 = sadd.s32 %s69, 1
      %p73 = scmp.eq.s32.totalorder %s19, 1
      %p74 = scmp.ne.s32.totalorder %s69, %s71
      %p75 = scmp.eq.s32.totalorder %s19, 0
      %p76 = por %p74, %p75
      %p77 = scmp.ne.s32.totalorder %s69, %s71
      %p78 = scmp.eq.s32.totalorder %s24, 1
      %p79 = por %p77, %p78
      %p80 = scmp.ne.s32.totalorder %s71, %s72
      %p81 = scmp.eq.s32.totalorder %s24, 0
      %p82 = por %p80, %p81
      %p83 = scmp.ne.s32.totalorder %s71, %s72
      %p84 = scmp.eq.s32.totalorder %s25, 1
      %p85 = por %p83, %p84
      %p87 = scmp.ne.s32.totalorder %s72, %s86
      %p88 = scmp.eq.s32.totalorder %s25, 0
      %p89 = por %p87, %p88
      %s90 = ssub.s32 %s19, %s26
      %p91 = scmp.eq.s32.totalorder %s90, 0
      %s93 = sadd.s32 %s92, 1
      %s94 = scalar_select %p91, %s92, %s93
      %p97 = pneg %p91
      %p98 = scmp.eq.s32.totalorder %s19, 1
      %p99 = por %p97, %p98
      %p100 = scmp.ne.s32.totalorder %s92, %s95
      %p101 = scmp.eq.s32.totalorder %s19, 0
      %p102 = por %p100, %p101
      %p103 = scmp.ne.s32.totalorder %s92, %s95
      %p104 = scmp.eq.s32.totalorder %s24, 1
      %p105 = por %p103, %p104
      %p106 = scmp.ne.s32.totalorder %s95, %s96
      %p107 = scmp.eq.s32.totalorder %s24, 0
      %p108 = por %p106, %p107
      %p109 = scmp.ne.s32.totalorder %s95, %s96
      %p110 = scmp.eq.s32.totalorder %s25, 1
      %p111 = por %p109, %p110
      %p113 = scmp.ne.s32.totalorder %s96, %s112
      %p114 = scmp.eq.s32.totalorder %s25, 0
      %p115 = por %p113, %p114
      %s116 = ssub.s32 %s19, %s26
      %p117 = scmp.eq.s32.totalorder %s116, 0
      %s119 = sadd.s32 %s118, 1
      %s120 = scalar_select %p117, %s118, %s119
      %p123 = pneg %p117
      %p124 = scmp.eq.s32.totalorder %s19, 1
      %p125 = por %p123, %p124
      %p126 = scmp.ne.s32.totalorder %s118, %s121
      %p127 = scmp.eq.s32.totalorder %s19, 0
      %p128 = por %p126, %p127
      %p129 = scmp.ne.s32.totalorder %s118, %s121
      %p130 = scmp.eq.s32.totalorder %s24, 1
      %p131 = por %p129, %p130
      %p132 = scmp.ne.s32.totalorder %s121, %s122
      %p133 = scmp.eq.s32.totalorder %s24, 0
      %p134 = por %p132, %p133
      %p135 = scmp.ne.s32.totalorder %s121, %s122
      %p136 = scmp.eq.s32.totalorder %s25, 1
      %p137 = por %p135, %p136
      %p139 = scmp.ne.s32.totalorder %s122, %s138
      %p140 = scmp.eq.s32.totalorder %s25, 0
      %p141 = por %p139, %p140
      %s142 = ssub.s32 %s19, %s26
      %p143 = scmp.eq.s32.totalorder %s142, 0
      %s145 = sadd.s32 %s144, 1
      %s146 = scalar_select %p143, %s144, %s145
      %p149 = pneg %p143
      %p150 = scmp.eq.s32.totalorder %s19, 1
      %p151 = por %p149, %p150
      %p152 = scmp.ne.s32.totalorder %s144, %s147
      %p153 = scmp.eq.s32.totalorder %s19, 0
      %p154 = por %p152, %p153
      %p155 = scmp.ne.s32.totalorder %s144, %s147
      %p156 = scmp.eq.s32.totalorder %s24, 1
      %p157 = por %p155, %p156
      %p158 = scmp.ne.s32.totalorder %s147, %s148
      %p159 = scmp.eq.s32.totalorder %s24, 0
      %p160 = por %p158, %p159
      %p161 = scmp.ne.s32.totalorder %s147, %s148
      %p162 = scmp.eq.s32.totalorder %s25, 1
      %p163 = por %p161, %p162
      %p165 = scmp.ne.s32.totalorder %s148, %s164
      %p166 = scmp.eq.s32.totalorder %s25, 0
      %p167 = por %p165, %p166
      %p168 = scmp.le.s32.totalorder 1, %s19
      %p169 = scmp.lt.s32.totalorder %s19, 3
      %p170 = pnand %p168, %p169
      %p171 = pneg %p170
      // Predicated region
      $region9: #{tpu_custom_call.1} parent=5 // pred_check
        _
      $region10: #{tpu_custom_call.1} parent=5 // pred_check_branch
        %173 = sbr.rel (%p170) target = $region12
      $region11: #{tpu_custom_call.1} parent=5 // pred_region
        %s174 = ssub.s32 %s19, 1
        // Predicated region
        $region13: #{tpu_custom_call.1} parent=11 // pred_check
          %p175 = pneg %p40
        $region14: #{tpu_custom_call.1} parent=11 // pred_check_branch
          %177 = sbr.rel (%p175) target = $region16
        $region15: #{tpu_custom_call.1} parent=11 // pred_region
          %s179 = ssub.s32 512, 512
          %180 = vsyncadd [#allocation3], %s179
          %s182 = sshll.u32 [#allocation2], 4
          %s183 = int_to_ptr.vmem [resolvable:$true] %s182
          %185 = dma.hbm_to_vmem [thread:$0]  %s0, 512, %s183, [#allocation3]
        $region16: #{tpu_custom_call.1} parent=11 // pred_fallthru
          _
        // Predicated region
        $region17: #{tpu_custom_call.1} parent=11 // pred_check
          %p186 = pneg %p61
        $region18: #{tpu_custom_call.1} parent=11 // pred_check_branch
          %188 = sbr.rel (%p186) target = $region20
        $region19: #{tpu_custom_call.1} parent=11 // pred_region
          %s190 = ssub.s32 8192, 8192
          %191 = vsyncadd [#allocation6], %s190
          %s192 = sshll.u32 [#allocation5], 4
          %s193 = int_to_ptr.vmem [resolvable:$true] %s192
          %198 = dma.hbm_to_vmem [thread:$0]  %s1, 8192, %s193, [#allocation6], 64, 64, 4
        $region20: #{tpu_custom_call.1} parent=11 // pred_fallthru
          _
        // Predicated region
        $region21: #{tpu_custom_call.1} parent=11 // pred_check
          %p199 = pneg %p82
        $region22: #{tpu_custom_call.1} parent=11 // pred_check_branch
          %201 = sbr.rel (%p199) target = $region24
        $region23: #{tpu_custom_call.1} parent=11 // pred_region
          %s203 = ssub.s32 16, 16
          %204 = vsyncadd [#allocation6], %s203
          %s206 = sshll.u32 [#allocation7], 4
          %s207 = int_to_ptr.vmem [resolvable:$true] %s206
          %209 = dma.hbm_to_vmem [thread:$0]  %s2, 16, %s207, [#allocation6]
        $region24: #{tpu_custom_call.1} parent=11 // pred_fallthru
          _
      $region12: #{tpu_custom_call.1} parent=5 // pred_fallthru
        _
      %p210 = scmp.lt.s32.totalorder %s19, 2
      // Predicated region
      $region25: #{tpu_custom_call.1} parent=5 // pred_check
        %p211 = pneg %p210
      $region26: #{tpu_custom_call.1} parent=5 // pred_check_branch
        %213 = sbr.rel (%p211) target = $region28
      $region27: #{tpu_custom_call.1} parent=5 // pred_region
        // Predicated region
        $region29: #{tpu_custom_call.1} parent=27 // pred_check
          %p214 = pneg %p102
        $region30: #{tpu_custom_call.1} parent=27 // pred_check_branch
          %216 = sbr.rel (%p214) target = $region32
        $region31: #{tpu_custom_call.1} parent=27 // pred_region
          %s217 = sand.u32 %s19, 1
          %s218 = scalar_lea.sflag [#allocation9], %s217
          %s219 = sand.u32 %s92, 1
          %s220 = smul.addr %s219, 1216
          %s221 = scalar_lea.vmem [#allocation8], %s220
          %s222 = smul.u32 19, %s19
          %s224 = ssub.s32 19456, 19456
          %225 = vsyncadd %s218, %s224
          %s226 = smul.addr %s222, 64
          %s227 = scalar_lea.hbm %s3, %s226
          %s228 = sshll.u32 %s221, 4
          %s229 = int_to_ptr.vmem [resolvable:$true] %s228
          %234 = dma.hbm_to_vmem [thread:$0]  %s227, 19456, %s229, %s218, 2432, 1216, 76
        $region32: #{tpu_custom_call.1} parent=27 // pred_fallthru
          _
        // Predicated region
        $region33: #{tpu_custom_call.1} parent=27 // pred_check
          %p235 = pneg %p128
        $region34: #{tpu_custom_call.1} parent=27 // pred_check_branch
          %237 = sbr.rel (%p235) target = $region36
        $region35: #{tpu_custom_call.1} parent=27 // pred_region
          %s238 = sand.u32 %s19, 1
          %s239 = scalar_lea.sflag [#allocation9], %s238
          %s240 = sand.u32 %s118, 1
          %s241 = smul.addr %s240, 19
          %s242 = scalar_lea.vmem [#allocation10], %s241
          %s243 = smul.u32 19, %s19
          %s245 = ssub.s32 304, 304
          %246 = vsyncadd %s239, %s245
          %s247 = smul.addr %s243, 16
          %s248 = scalar_lea.hbm %s4, %s247
          %s250 = sshll.u32 %s242, 4
          %s251 = int_to_ptr.vmem [resolvable:$true] %s250
          %253 = dma.hbm_to_vmem [thread:$0]  %s248, 304, %s251, %s239
        $region36: #{tpu_custom_call.1} parent=27 // pred_fallthru
          _
      $region28: #{tpu_custom_call.1} parent=5 // pred_fallthru
        _
      %p254 = scmp.le.s32.totalorder 1, %s19
      %p255 = scmp.lt.s32.totalorder %s19, 3
      %p256 = pnand %p254, %p255
      %p257 = pneg %p256
      // Predicated region
      $region37: #{tpu_custom_call.1} parent=5 // pred_check
        _
      $region38: #{tpu_custom_call.1} parent=5 // pred_check_branch
        %259 = sbr.rel (%p256) target = $region40
      $region39: #{tpu_custom_call.1} parent=5 // pred_region
        %s260 = ssub.s32 %s19, 1
        // Predicated region
        $region41: #{tpu_custom_call.1} parent=39 // pred_check
          %p261 = pneg %p40
        $region42: #{tpu_custom_call.1} parent=39 // pred_check_branch
          %263 = sbr.rel (%p261) target = $region44
        $region43: #{tpu_custom_call.1} parent=39 // pred_region
          %264 = dma.done [#allocation3], 512
        $region44: #{tpu_custom_call.1} parent=39 // pred_fallthru
          _
        // Predicated region
        $region45: #{tpu_custom_call.1} parent=39 // pred_check
          %p265 = pneg %p61
        $region46: #{tpu_custom_call.1} parent=39 // pred_check_branch
          %267 = sbr.rel (%p265) target = $region48
        $region47: #{tpu_custom_call.1} parent=39 // pred_region
          %268 = dma.done [#allocation6], 8192
        $region48: #{tpu_custom_call.1} parent=39 // pred_fallthru
          _
        // Predicated region
        $region49: #{tpu_custom_call.1} parent=39 // pred_check
          %p269 = pneg %p82
        $region50: #{tpu_custom_call.1} parent=39 // pred_check_branch
          %271 = sbr.rel (%p269) target = $region52
        $region51: #{tpu_custom_call.1} parent=39 // pred_region
          %272 = dma.done [#allocation6], 16
        $region52: #{tpu_custom_call.1} parent=39 // pred_fallthru
          _
        %s273 = sand.u32 %s24, 1
        %s274 = scalar_lea.sflag [#allocation9], %s273
        %s275 = sand.u32 %s95, 1
        %s276 = smul.addr %s275, 1216
        %s277 = scalar_lea.vmem [#allocation8], %s276
        // Predicated region
        $region53: #{tpu_custom_call.1} parent=39 // pred_check
          %p278 = pneg %p108
        $region54: #{tpu_custom_call.1} parent=39 // pred_check_branch
          %280 = sbr.rel (%p278) target = $region56
        $region55: #{tpu_custom_call.1} parent=39 // pred_region
          %281 = dma.done %s274, 19456
        $region56: #{tpu_custom_call.1} parent=39 // pred_fallthru
          _
        %s282 = sand.u32 %s24, 1
        %s283 = scalar_lea.sflag [#allocation9], %s282
        %s284 = sand.u32 %s121, 1
        %s285 = smul.addr %s284, 19
        %s286 = scalar_lea.vmem [#allocation10], %s285
        // Predicated region
        $region57: #{tpu_custom_call.1} parent=39 // pred_check
          %p287 = pneg %p134
        $region58: #{tpu_custom_call.1} parent=39 // pred_check_branch
          %289 = sbr.rel (%p287) target = $region60
        $region59: #{tpu_custom_call.1} parent=39 // pred_region
          %290 = dma.done %s283, 304
        $region60: #{tpu_custom_call.1} parent=39 // pred_fallthru
          _
        %p291 = pneg %p40
        %p292 = pneg %p37
        %p293 = pneg %p61
        %p294 = pneg %p58
        %p295 = pneg %p82
        %p296 = pneg %p79
        %s297 = sand.u32 %s24, 1
        %s298 = scalar_lea.sflag [#allocation9], %s297
        %s299 = sand.u32 %s95, 1
        %s300 = smul.addr %s299, 1216
        %s301 = scalar_lea.vmem [#allocation8], %s300
        %p302 = pneg %p108
        %p303 = pneg %p105
        %s304 = sand.u32 %s24, 1
        %s305 = scalar_lea.sflag [#allocation9], %s304
        %s306 = sand.u32 %s121, 1
        %s307 = smul.addr %s306, 19
        %s308 = scalar_lea.vmem [#allocation10], %s307
        %p309 = pneg %p134
        %p310 = pneg %p131
        %p311 = pneg %p160
        %p312 = pneg %p157
        %s313 = sand.u32 %s147, 1
        %s314 = scalar_lea.sflag [#allocation4], %s313
        %s315 = sand.u32 %s147, 1
        %s316 = smul.addr %s315, 152
        %s317 = scalar_lea.vmem [#allocation11], %s316
        %s318 = smul.u32 19, %s24
        %s319 = smul.u32 19, %s24
        %s320 = smul.u32 19, %s24
        %v322 = vld [vmem:[#allocation2] sm:$0xff]
        %v323 = vld [vmem:[#allocation2 + $0x8] sm:$0xff]
        %v324 = vld [vmem:[#allocation2 + $0x10] sm:$0xff]
        %v325 = vld [vmem:[#allocation2 + $0x18] sm:$0xff]
        %v326 = vld [vmem:[#allocation5] sm:$0xf]
        %v327 = vld [vmem:[#allocation5 + $0x4] sm:$0xf]
        %v328 = vld [vmem:[#allocation5 + $0x8] sm:$0xf]
        %v329 = vld [vmem:[#allocation5 + $0xc] sm:$0xf]
        %v330 = vld [vmem:[#allocation5 + $0x10] sm:$0xf]
        %v331 = vld [vmem:[#allocation5 + $0x14] sm:$0xf]
        %v332 = vld [vmem:[#allocation5 + $0x18] sm:$0xf]
        %v333 = vld [vmem:[#allocation5 + $0x1c] sm:$0xf]
        %v334 = vld [vmem:[#allocation5 + $0x20] sm:$0xf]
        %v335 = vld [vmem:[#allocation5 + $0x24] sm:$0xf]
        %v336 = vld [vmem:[#allocation5 + $0x28] sm:$0xf]
        %v337 = vld [vmem:[#allocation5 + $0x2c] sm:$0xf]
        %v338 = vld [vmem:[#allocation5 + $0x30] sm:$0xf]
        %v339 = vld [vmem:[#allocation5 + $0x34] sm:$0xf]
        %v340 = vld [vmem:[#allocation5 + $0x38] sm:$0xf]
        %v341 = vld [vmem:[#allocation5 + $0x3c] sm:$0xf]
        %v342 = vld [vmem:[#allocation5 + $0x40] sm:$0xf]
        %v343 = vld [vmem:[#allocation5 + $0x44] sm:$0xf]
        %v344 = vld [vmem:[#allocation5 + $0x48] sm:$0xf]
        %v345 = vld [vmem:[#allocation5 + $0x4c] sm:$0xf]
        %v346 = vld [vmem:[#allocation5 + $0x50] sm:$0xf]
        %v347 = vld [vmem:[#allocation5 + $0x54] sm:$0xf]
        %v348 = vld [vmem:[#allocation5 + $0x58] sm:$0xf]
        %v349 = vld [vmem:[#allocation5 + $0x5c] sm:$0xf]
        %v350 = vld [vmem:[#allocation5 + $0x60] sm:$0xf]
        %v351 = vld [vmem:[#allocation5 + $0x64] sm:$0xf]
        %v352 = vld [vmem:[#allocation5 + $0x68] sm:$0xf]
        %v353 = vld [vmem:[#allocation5 + $0x6c] sm:$0xf]
        %v354 = vld [vmem:[#allocation5 + $0x70] sm:$0xf]
        %v355 = vld [vmem:[#allocation5 + $0x74] sm:$0xf]
        %v356 = vld [vmem:[#allocation5 + $0x78] sm:$0xf]
        %v357 = vld [vmem:[#allocation5 + $0x7c] sm:$0xf]
        %v358 = vld [vmem:[#allocation5 + $0x80] sm:$0xf]
        %v359 = vld [vmem:[#allocation5 + $0x84] sm:$0xf]
        %v360 = vld [vmem:[#allocation5 + $0x88] sm:$0xf]
        %v361 = vld [vmem:[#allocation5 + $0x8c] sm:$0xf]
        %v362 = vld [vmem:[#allocation5 + $0x90] sm:$0xf]
        %v363 = vld [vmem:[#allocation5 + $0x94] sm:$0xf]
        %v364 = vld [vmem:[#allocation5 + $0x98] sm:$0xf]
        %v365 = vld [vmem:[#allocation5 + $0x9c] sm:$0xf]
        %v366 = vld [vmem:[#allocation5 + $0xa0] sm:$0xf]
        %v367 = vld [vmem:[#allocation5 + $0xa4] sm:$0xf]
        %v368 = vld [vmem:[#allocation5 + $0xa8] sm:$0xf]
        %v369 = vld [vmem:[#allocation5 + $0xac] sm:$0xf]
        %v370 = vld [vmem:[#allocation5 + $0xb0] sm:$0xf]
        %v371 = vld [vmem:[#allocation5 + $0xb4] sm:$0xf]
        %v372 = vld [vmem:[#allocation5 + $0xb8] sm:$0xf]
        %v373 = vld [vmem:[#allocation5 + $0xbc] sm:$0xf]
        %v374 = vld [vmem:[#allocation5 + $0xc0] sm:$0xf]
        %v375 = vld [vmem:[#allocation5 + $0xc4] sm:$0xf]
        %v376 = vld [vmem:[#allocation5 + $0xc8] sm:$0xf]
        %v377 = vld [vmem:[#allocation5 + $0xcc] sm:$0xf]
        %v378 = vld [vmem:[#allocation5 + $0xd0] sm:$0xf]
        %v379 = vld [vmem:[#allocation5 + $0xd4] sm:$0xf]
        %v380 = vld [vmem:[#allocation5 + $0xd8] sm:$0xf]
        %v381 = vld [vmem:[#allocation5 + $0xdc] sm:$0xf]
        %v382 = vld [vmem:[#allocation5 + $0xe0] sm:$0xf]
        %v383 = vld [vmem:[#allocation5 + $0xe4] sm:$0xf]
        %v384 = vld [vmem:[#allocation5 + $0xe8] sm:$0xf]
        %v385 = vld [vmem:[#allocation5 + $0xec] sm:$0xf]
        %v386 = vld [vmem:[#allocation5 + $0xf0] sm:$0xf]
        %v387 = vld [vmem:[#allocation5 + $0xf4] sm:$0xf]
        %v388 = vld [vmem:[#allocation5 + $0xf8] sm:$0xf]
        %v389 = vld [vmem:[#allocation5 + $0xfc] sm:$0xf]
        %v390 = vld [vmem:[#allocation5 + $0x100] sm:$0xf]
        %v391 = vld [vmem:[#allocation5 + $0x104] sm:$0xf]
        %v392 = vld [vmem:[#allocation5 + $0x108] sm:$0xf]
        %v393 = vld [vmem:[#allocation5 + $0x10c] sm:$0xf]
        %v394 = vld [vmem:[#allocation5 + $0x110] sm:$0xf]
        %v395 = vld [vmem:[#allocation5 + $0x114] sm:$0xf]
        %v396 = vld [vmem:[#allocation5 + $0x118] sm:$0xf]
        %v397 = vld [vmem:[#allocation5 + $0x11c] sm:$0xf]
        %v398 = vld [vmem:[#allocation5 + $0x120] sm:$0xf]
        %v399 = vld [vmem:[#allocation5 + $0x124] sm:$0xf]
        %v400 = vld [vmem:[#allocation5 + $0x128] sm:$0xf]
        %v401 = vld [vmem:[#allocation5 + $0x12c] sm:$0xf]
        %v402 = vld [vmem:[#allocation5 + $0x130] sm:$0xf]
        %v403 = vld [vmem:[#allocation5 + $0x134] sm:$0xf]
        %v404 = vld [vmem:[#allocation5 + $0x138] sm:$0xf]
        %v405 = vld [vmem:[#allocation5 + $0x13c] sm:$0xf]
        %v406 = vld [vmem:[#allocation5 + $0x140] sm:$0xf]
        %v407 = vld [vmem:[#allocation5 + $0x144] sm:$0xf]
        %v408 = vld [vmem:[#allocation5 + $0x148] sm:$0xf]
        %v409 = vld [vmem:[#allocation5 + $0x14c] sm:$0xf]
        %v410 = vld [vmem:[#allocation5 + $0x150] sm:$0xf]
        %v411 = vld [vmem:[#allocation5 + $0x154] sm:$0xf]
        %v412 = vld [vmem:[#allocation5 + $0x158] sm:$0xf]
        %v413 = vld [vmem:[#allocation5 + $0x15c] sm:$0xf]
        %v414 = vld [vmem:[#allocation5 + $0x160] sm:$0xf]
        %v415 = vld [vmem:[#allocation5 + $0x164] sm:$0xf]
        %v416 = vld [vmem:[#allocation5 + $0x168] sm:$0xf]
        %v417 = vld [vmem:[#allocation5 + $0x16c] sm:$0xf]
        %v418 = vld [vmem:[#allocation5 + $0x170] sm:$0xf]
        %v419 = vld [vmem:[#allocation5 + $0x174] sm:$0xf]
        %v420 = vld [vmem:[#allocation5 + $0x178] sm:$0xf]
        %v421 = vld [vmem:[#allocation5 + $0x17c] sm:$0xf]
        %v422 = vld [vmem:[#allocation5 + $0x180] sm:$0xf]
        %v423 = vld [vmem:[#allocation5 + $0x184] sm:$0xf]
        %v424 = vld [vmem:[#allocation5 + $0x188] sm:$0xf]
        %v425 = vld [vmem:[#allocation5 + $0x18c] sm:$0xf]
        %v426 = vld [vmem:[#allocation5 + $0x190] sm:$0xf]
        %v427 = vld [vmem:[#allocation5 + $0x194] sm:$0xf]
        %v428 = vld [vmem:[#allocation5 + $0x198] sm:$0xf]
        %v429 = vld [vmem:[#allocation5 + $0x19c] sm:$0xf]
        %v430 = vld [vmem:[#allocation5 + $0x1a0] sm:$0xf]
        %v431 = vld [vmem:[#allocation5 + $0x1a4] sm:$0xf]
        %v432 = vld [vmem:[#allocation5 + $0x1a8] sm:$0xf]
        %v433 = vld [vmem:[#allocation5 + $0x1ac] sm:$0xf]
        %v434 = vld [vmem:[#allocation5 + $0x1b0] sm:$0xf]
        %v435 = vld [vmem:[#allocation5 + $0x1b4] sm:$0xf]
        %v436 = vld [vmem:[#allocation5 + $0x1b8] sm:$0xf]
        %v437 = vld [vmem:[#allocation5 + $0x1bc] sm:$0xf]
        %v438 = vld [vmem:[#allocation5 + $0x1c0] sm:$0xf]
        %v439 = vld [vmem:[#allocation5 + $0x1c4] sm:$0xf]
        %v440 = vld [vmem:[#allocation5 + $0x1c8] sm:$0xf]
        %v441 = vld [vmem:[#allocation5 + $0x1cc] sm:$0xf]
        %v442 = vld [vmem:[#allocation5 + $0x1d0] sm:$0xf]
        %v443 = vld [vmem:[#allocation5 + $0x1d4] sm:$0xf]
        %v444 = vld [vmem:[#allocation5 + $0x1d8] sm:$0xf]
        %v445 = vld [vmem:[#allocation5 + $0x1dc] sm:$0xf]
        %v446 = vld [vmem:[#allocation5 + $0x1e0] sm:$0xf]
        %v447 = vld [vmem:[#allocation5 + $0x1e4] sm:$0xf]
        %v448 = vld [vmem:[#allocation5 + $0x1e8] sm:$0xf]
        %v449 = vld [vmem:[#allocation5 + $0x1ec] sm:$0xf]
        %v450 = vld [vmem:[#allocation5 + $0x1f0] sm:$0xf]
        %v451 = vld [vmem:[#allocation5 + $0x1f4] sm:$0xf]
        %v452 = vld [vmem:[#allocation5 + $0x1f8] sm:$0xf]
        %v453 = vld [vmem:[#allocation5 + $0x1fc] sm:$0xf]
        %v454 = vld [vmem:[#allocation7] sm:$0x1]
        %v456 = vlaneseq
        %v457 = vshrl.u32 %v456, 7
        %v458 = vsub.s32 0, %v457
        %v459 = vrot.slane %v454, %v458
        %v465 = vunpack.c.l.b16 %v322
        %v466 = vunpack.c.h.b16 %v322
        %v467 = vunpack.c.l.b16 %v323
        %v468 = vunpack.c.h.b16 %v323
        %v469 = vunpack.c.l.b16 %v324
        %v470 = vunpack.c.h.b16 %v324
        %v471 = vunpack.c.l.b16 %v325
        %v472 = vunpack.c.h.b16 %v325
        %v473 = vpack.c.b16 %v465, %v465
        %v474 = vpack.c.b16 %v466, %v466
        %v475 = vpack.c.b16 %v467, %v467
        %v476 = vpack.c.b16 %v468, %v468
        %v477 = vpack.c.b16 %v469, %v469
        %v478 = vpack.c.b16 %v470, %v470
        %v479 = vpack.c.b16 %v471, %v471
        %v480 = vpack.c.b16 %v472, %v472
        %v617 = vunpack.c.l.b16 %v326
        %v618 = vunpack.c.l.b16 %v327
        %v619 = vunpack.c.l.b16 %v328
        %v620 = vunpack.c.l.b16 %v329
        %v621 = vunpack.c.l.b16 %v330
        %v622 = vunpack.c.l.b16 %v331
        %v623 = vunpack.c.l.b16 %v332
        %v624 = vunpack.c.l.b16 %v333
        %v625 = vunpack.c.l.b16 %v334
        %v626 = vunpack.c.l.b16 %v335
        %v627 = vunpack.c.l.b16 %v336
        %v628 = vunpack.c.l.b16 %v337
        %v629 = vunpack.c.l.b16 %v338
        %v630 = vunpack.c.l.b16 %v339
        %v631 = vunpack.c.l.b16 %v340
        %v632 = vunpack.c.l.b16 %v341
        %v633 = vunpack.c.l.b16 %v342
        %v634 = vunpack.c.l.b16 %v343
        %v635 = vunpack.c.l.b16 %v344
        %v636 = vunpack.c.l.b16 %v345
        %v637 = vunpack.c.l.b16 %v346
        %v638 = vunpack.c.l.b16 %v347
        %v639 = vunpack.c.l.b16 %v348
        %v640 = vunpack.c.l.b16 %v349
        %v641 = vunpack.c.l.b16 %v350
        %v642 = vunpack.c.l.b16 %v351
        %v643 = vunpack.c.l.b16 %v352
        %v644 = vunpack.c.l.b16 %v353
        %v645 = vunpack.c.l.b16 %v354
        %v646 = vunpack.c.l.b16 %v355
        %v647 = vunpack.c.l.b16 %v356
        %v648 = vunpack.c.l.b16 %v357
        %v649 = vunpack.c.l.b16 %v358
        %v650 = vunpack.c.l.b16 %v359
        %v651 = vunpack.c.l.b16 %v360
        %v652 = vunpack.c.l.b16 %v361
        %v653 = vunpack.c.l.b16 %v362
        %v654 = vunpack.c.l.b16 %v363
        %v655 = vunpack.c.l.b16 %v364
        %v656 = vunpack.c.l.b16 %v365
        %v657 = vunpack.c.l.b16 %v366
        %v658 = vunpack.c.l.b16 %v367
        %v659 = vunpack.c.l.b16 %v368
        %v660 = vunpack.c.l.b16 %v369
        %v661 = vunpack.c.l.b16 %v370
        %v662 = vunpack.c.l.b16 %v371
        %v663 = vunpack.c.l.b16 %v372
        %v664 = vunpack.c.l.b16 %v373
        %v665 = vunpack.c.l.b16 %v374
        %v666 = vunpack.c.l.b16 %v375
        %v667 = vunpack.c.l.b16 %v376
        %v668 = vunpack.c.l.b16 %v377
        %v669 = vunpack.c.l.b16 %v378
        %v670 = vunpack.c.l.b16 %v379
        %v671 = vunpack.c.l.b16 %v380
        %v672 = vunpack.c.l.b16 %v381
        %v673 = vunpack.c.l.b16 %v382
        %v674 = vunpack.c.l.b16 %v383
        %v675 = vunpack.c.l.b16 %v384
        %v676 = vunpack.c.l.b16 %v385
        %v677 = vunpack.c.l.b16 %v386
        %v678 = vunpack.c.l.b16 %v387
        %v679 = vunpack.c.l.b16 %v388
        %v680 = vunpack.c.l.b16 %v389
        %v681 = vunpack.c.l.b16 %v390
        %v682 = vunpack.c.l.b16 %v391
        %v683 = vunpack.c.l.b16 %v392
        %v684 = vunpack.c.l.b16 %v393
        %v685 = vunpack.c.l.b16 %v394
        %v686 = vunpack.c.l.b16 %v395
        %v687 = vunpack.c.l.b16 %v396
        %v688 = vunpack.c.l.b16 %v397
        %v689 = vunpack.c.l.b16 %v398
        %v690 = vunpack.c.l.b16 %v399
        %v691 = vunpack.c.l.b16 %v400
        %v692 = vunpack.c.l.b16 %v401
        %v693 = vunpack.c.l.b16 %v402
        %v694 = vunpack.c.l.b16 %v403
        %v695 = vunpack.c.l.b16 %v404
        %v696 = vunpack.c.l.b16 %v405
        %v697 = vunpack.c.l.b16 %v406
        %v698 = vunpack.c.l.b16 %v407
        %v699 = vunpack.c.l.b16 %v408
        %v700 = vunpack.c.l.b16 %v409
        %v701 = vunpack.c.l.b16 %v410
        %v702 = vunpack.c.l.b16 %v411
        %v703 = vunpack.c.l.b16 %v412
        %v704 = vunpack.c.l.b16 %v413
        %v705 = vunpack.c.l.b16 %v414
        %v706 = vunpack.c.l.b16 %v415
        %v707 = vunpack.c.l.b16 %v416
        %v708 = vunpack.c.l.b16 %v417
        %v709 = vunpack.c.l.b16 %v418
        %v710 = vunpack.c.l.b16 %v419
        %v711 = vunpack.c.l.b16 %v420
        %v712 = vunpack.c.l.b16 %v421
        %v713 = vunpack.c.l.b16 %v422
        %v714 = vunpack.c.l.b16 %v423
        %v715 = vunpack.c.l.b16 %v424
        %v716 = vunpack.c.l.b16 %v425
        %v717 = vunpack.c.l.b16 %v426
        %v718 = vunpack.c.l.b16 %v427
        %v719 = vunpack.c.l.b16 %v428
        %v720 = vunpack.c.l.b16 %v429
        %v721 = vunpack.c.l.b16 %v430
        %v722 = vunpack.c.l.b16 %v431
        %v723 = vunpack.c.l.b16 %v432
        %v724 = vunpack.c.l.b16 %v433
        %v725 = vunpack.c.l.b16 %v434
        %v726 = vunpack.c.l.b16 %v435
        %v727 = vunpack.c.l.b16 %v436
        %v728 = vunpack.c.l.b16 %v437
        %v729 = vunpack.c.l.b16 %v438
        %v730 = vunpack.c.l.b16 %v439
        %v731 = vunpack.c.l.b16 %v440
        %v732 = vunpack.c.l.b16 %v441
        %v733 = vunpack.c.l.b16 %v442
        %v734 = vunpack.c.l.b16 %v443
        %v735 = vunpack.c.l.b16 %v444
        %v736 = vunpack.c.l.b16 %v445
        %v737 = vunpack.c.l.b16 %v446
        %v738 = vunpack.c.l.b16 %v447
        %v739 = vunpack.c.l.b16 %v448
        %v740 = vunpack.c.l.b16 %v449
        %v741 = vunpack.c.l.b16 %v450
        %v742 = vunpack.c.l.b16 %v451
        %v743 = vunpack.c.l.b16 %v452
        %v744 = vunpack.c.l.b16 %v453
        %v745 = vpack.c.b16 %v618, %v617
        %v746 = vpack.c.b16 %v620, %v619
        %v747 = vpack.c.b16 %v622, %v621
        %v748 = vpack.c.b16 %v624, %v623
        %v749 = vpack.c.b16 %v626, %v625
        %v750 = vpack.c.b16 %v628, %v627
        %v751 = vpack.c.b16 %v630, %v629
        %v752 = vpack.c.b16 %v632, %v631
        %v753 = vpack.c.b16 %v634, %v633
        %v754 = vpack.c.b16 %v636, %v635
        %v755 = vpack.c.b16 %v638, %v637
        %v756 = vpack.c.b16 %v640, %v639
        %v757 = vpack.c.b16 %v642, %v641
        %v758 = vpack.c.b16 %v644, %v643
        %v759 = vpack.c.b16 %v646, %v645
        %v760 = vpack.c.b16 %v648, %v647
        %v761 = vpack.c.b16 %v650, %v649
        %v762 = vpack.c.b16 %v652, %v651
        %v763 = vpack.c.b16 %v654, %v653
        %v764 = vpack.c.b16 %v656, %v655
        %v765 = vpack.c.b16 %v658, %v657
        %v766 = vpack.c.b16 %v660, %v659
        %v767 = vpack.c.b16 %v662, %v661
        %v768 = vpack.c.b16 %v664, %v663
        %v769 = vpack.c.b16 %v666, %v665
        %v770 = vpack.c.b16 %v668, %v667
        %v771 = vpack.c.b16 %v670, %v669
        %v772 = vpack.c.b16 %v672, %v671
        %v773 = vpack.c.b16 %v674, %v673
        %v774 = vpack.c.b16 %v676, %v675
        %v775 = vpack.c.b16 %v678, %v677
        %v776 = vpack.c.b16 %v680, %v679
        %v777 = vpack.c.b16 %v682, %v681
        %v778 = vpack.c.b16 %v684, %v683
        %v779 = vpack.c.b16 %v686, %v685
        %v780 = vpack.c.b16 %v688, %v687
        %v781 = vpack.c.b16 %v690, %v689
        %v782 = vpack.c.b16 %v692, %v691
        %v783 = vpack.c.b16 %v694, %v693
        %v784 = vpack.c.b16 %v696, %v695
        %v785 = vpack.c.b16 %v698, %v697
        %v786 = vpack.c.b16 %v700, %v699
        %v787 = vpack.c.b16 %v702, %v701
        %v788 = vpack.c.b16 %v704, %v703
        %v789 = vpack.c.b16 %v706, %v705
        %v790 = vpack.c.b16 %v708, %v707
        %v791 = vpack.c.b16 %v710, %v709
        %v792 = vpack.c.b16 %v712, %v711
        %v793 = vpack.c.b16 %v714, %v713
        %v794 = vpack.c.b16 %v716, %v715
        %v795 = vpack.c.b16 %v718, %v717
        %v796 = vpack.c.b16 %v720, %v719
        %v797 = vpack.c.b16 %v722, %v721
        %v798 = vpack.c.b16 %v724, %v723
        %v799 = vpack.c.b16 %v726, %v725
        %v800 = vpack.c.b16 %v728, %v727
        %v801 = vpack.c.b16 %v730, %v729
        %v802 = vpack.c.b16 %v732, %v731
        %v803 = vpack.c.b16 %v734, %v733
        %v804 = vpack.c.b16 %v736, %v735
        %v805 = vpack.c.b16 %v738, %v737
        %v806 = vpack.c.b16 %v740, %v739
        %v807 = vpack.c.b16 %v742, %v741
        %v808 = vpack.c.b16 %v744, %v743
        %873 = vmatprep.subr.bf16.mxu0 0
        %874 = vmatpush1.bf16.msra.mxu0 %v752
        %875 = vmatprep.subr.bf16.mxu0 0
        %876 = vmatpush1.bf16.msra.mxu0 %v751
        %877 = vmatprep.subr.bf16.mxu0 0
        %878 = vmatpush1.bf16.msra.mxu0 %v750
        %879 = vmatprep.subr.bf16.mxu0 0
        %880 = vmatpush1.bf16.msra.mxu0 %v749
        %881 = vmatprep.subr.bf16.mxu0 0
        %882 = vmatpush1.bf16.msra.mxu0 %v748
        %883 = vmatprep.subr.bf16.mxu0 0
        %884 = vmatpush1.bf16.msra.mxu0 %v747
        %885 = vmatprep.subr.bf16.mxu0 0
        %886 = vmatpush1.bf16.msra.mxu0 %v746
        %887 = vmatprep.subr.bf16.mxu0 0
        %888 = vmatpush1.bf16.msra.mxu0 %v745
        %889 = vmatprep.subr.bf16.mxu0 0
        %890 = vmatpush2.bf16.msra.mxu0 %v760
        %891 = vmatprep.subr.bf16.mxu0 0
        %892 = vmatpush2.bf16.msra.mxu0 %v759
        %893 = vmatprep.subr.bf16.mxu0 0
        %894 = vmatpush2.bf16.msra.mxu0 %v758
        %895 = vmatprep.subr.bf16.mxu0 0
        %896 = vmatpush2.bf16.msra.mxu0 %v757
        %897 = vmatprep.subr.bf16.mxu0 0
        %898 = vmatpush2.bf16.msra.mxu0 %v756
        %899 = vmatprep.subr.bf16.mxu0 0
        %900 = vmatpush2.bf16.msra.mxu0 %v755
        %901 = vmatprep.subr.bf16.mxu0 0
        %902 = vmatpush2.bf16.msra.mxu0 %v754
        %903 = vmatprep.subr.bf16.mxu0 0
        %904 = vmatpush2.bf16.msra.mxu0 %v753
        %905 = vmatprep.mubr.bf16.mxu0 %v474
        %906 = vmatmul.mubr.bf16.gmra.mxu0 %v473
        %v907 = vpop.f32.mrf.mxu0
        %v908 = vadd.f32 %v459, %v907
        %v909 = vpop.f32.mrf.mxu0
        %v910 = vpop.f32.mrf.mxu0
        %v911 = vpop.f32.mrf.mxu0
        %912 = vdwg.mxu0
        %913 = vmatprep.subr.bf16.mxu0 0
        %914 = vmatpush1.bf16.msra.mxu0 %v768
        %915 = vmatprep.subr.bf16.mxu0 0
        %916 = vmatpush1.bf16.msra.mxu0 %v767
        %917 = vmatprep.subr.bf16.mxu0 0
        %918 = vmatpush1.bf16.msra.mxu0 %v766
        %919 = vmatprep.subr.bf16.mxu0 0
        %920 = vmatpush1.bf16.msra.mxu0 %v765
        %921 = vmatprep.subr.bf16.mxu0 0
        %922 = vmatpush1.bf16.msra.mxu0 %v764
        %923 = vmatprep.subr.bf16.mxu0 0
        %924 = vmatpush1.bf16.msra.mxu0 %v763
        %925 = vmatprep.subr.bf16.mxu0 0
        %926 = vmatpush1.bf16.msra.mxu0 %v762
        %927 = vmatprep.subr.bf16.mxu0 0
        %928 = vmatpush1.bf16.msra.mxu0 %v761
        %929 = vmatprep.subr.bf16.mxu0 0
        %930 = vmatpush2.bf16.msra.mxu0 %v776
        %931 = vmatprep.subr.bf16.mxu0 0
        %932 = vmatpush2.bf16.msra.mxu0 %v775
        %933 = vmatprep.subr.bf16.mxu0 0
        %934 = vmatpush2.bf16.msra.mxu0 %v774
        %935 = vmatprep.subr.bf16.mxu0 0
        %936 = vmatpush2.bf16.msra.mxu0 %v773
        %937 = vmatprep.subr.bf16.mxu0 0
        %938 = vmatpush2.bf16.msra.mxu0 %v772
        %939 = vmatprep.subr.bf16.mxu0 0
        %940 = vmatpush2.bf16.msra.mxu0 %v771
        %941 = vmatprep.subr.bf16.mxu0 0
        %942 = vmatpush2.bf16.msra.mxu0 %v770
        %943 = vmatprep.subr.bf16.mxu0 0
        %944 = vmatpush2.bf16.msra.mxu0 %v769
        %945 = vmatprep.mubr.bf16.mxu0 %v476
        %946 = vmatmul.mubr.bf16.gmra.mxu0 %v475
        %v947 = vpop.f32.mrf.mxu0
        %v948 = vadd.f32 %v908, %v947
        %v949 = vpop.f32.mrf.mxu0
        %v950 = vpop.f32.mrf.mxu0
        %v951 = vpop.f32.mrf.mxu0
        %952 = vdwg.mxu0
        %953 = vmatprep.subr.bf16.mxu0 0
        %954 = vmatpush1.bf16.msra.mxu0 %v784
        %955 = vmatprep.subr.bf16.mxu0 0
        %956 = vmatpush1.bf16.msra.mxu0 %v783
        %957 = vmatprep.subr.bf16.mxu0 0
        %958 = vmatpush1.bf16.msra.mxu0 %v782
        %959 = vmatprep.subr.bf16.mxu0 0
        %960 = vmatpush1.bf16.msra.mxu0 %v781
        %961 = vmatprep.subr.bf16.mxu0 0
        %962 = vmatpush1.bf16.msra.mxu0 %v780
        %963 = vmatprep.subr.bf16.mxu0 0
        %964 = vmatpush1.bf16.msra.mxu0 %v779
        %965 = vmatprep.subr.bf16.mxu0 0
        %966 = vmatpush1.bf16.msra.mxu0 %v778
        %967 = vmatprep.subr.bf16.mxu0 0
        %968 = vmatpush1.bf16.msra.mxu0 %v777
        %969 = vmatprep.subr.bf16.mxu0 0
        %970 = vmatpush2.bf16.msra.mxu0 %v792
        %971 = vmatprep.subr.bf16.mxu0 0
        %972 = vmatpush2.bf16.msra.mxu0 %v791
        %973 = vmatprep.subr.bf16.mxu0 0
        %974 = vmatpush2.bf16.msra.mxu0 %v790
        %975 = vmatprep.subr.bf16.mxu0 0
        %976 = vmatpush2.bf16.msra.mxu0 %v789
        %977 = vmatprep.subr.bf16.mxu0 0
        %978 = vmatpush2.bf16.msra.mxu0 %v788
        %979 = vmatprep.subr.bf16.mxu0 0
        %980 = vmatpush2.bf16.msra.mxu0 %v787
        %981 = vmatprep.subr.bf16.mxu0 0
        %982 = vmatpush2.bf16.msra.mxu0 %v786
        %983 = vmatprep.subr.bf16.mxu0 0
        %984 = vmatpush2.bf16.msra.mxu0 %v785
        %985 = vmatprep.mubr.bf16.mxu0 %v478
        %986 = vmatmul.mubr.bf16.gmra.mxu0 %v477
        %v987 = vpop.f32.mrf.mxu0
        %v988 = vadd.f32 %v948, %v987
        %v989 = vpop.f32.mrf.mxu0
        %v990 = vpop.f32.mrf.mxu0
        %v991 = vpop.f32.mrf.mxu0
        %992 = vdwg.mxu0
        %993 = vmatprep.subr.bf16.mxu0 0
        %994 = vmatpush1.bf16.msra.mxu0 %v800
        %995 = vmatprep.subr.bf16.mxu0 0
        %996 = vmatpush1.bf16.msra.mxu0 %v799
        %997 = vmatprep.subr.bf16.mxu0 0
        %998 = vmatpush1.bf16.msra.mxu0 %v798
        %999 = vmatprep.subr.bf16.mxu0 0
        %1000 = vmatpush1.bf16.msra.mxu0 %v797
        %1001 = vmatprep.subr.bf16.mxu0 0
        %1002 = vmatpush1.bf16.msra.mxu0 %v796
        %1003 = vmatprep.subr.bf16.mxu0 0
        %1004 = vmatpush1.bf16.msra.mxu0 %v795
        %1005 = vmatprep.subr.bf16.mxu0 0
        %1006 = vmatpush1.bf16.msra.mxu0 %v794
        %1007 = vmatprep.subr.bf16.mxu0 0
        %1008 = vmatpush1.bf16.msra.mxu0 %v793
        %1009 = vmatprep.subr.bf16.mxu0 0
        %1010 = vmatpush2.bf16.msra.mxu0 %v808
        %1011 = vmatprep.subr.bf16.mxu0 0
        %1012 = vmatpush2.bf16.msra.mxu0 %v807
        %1013 = vmatprep.subr.bf16.mxu0 0
        %1014 = vmatpush2.bf16.msra.mxu0 %v806
        %1015 = vmatprep.subr.bf16.mxu0 0
        %1016 = vmatpush2.bf16.msra.mxu0 %v805
        %1017 = vmatprep.subr.bf16.mxu0 0
        %1018 = vmatpush2.bf16.msra.mxu0 %v804
        %1019 = vmatprep.subr.bf16.mxu0 0
        %1020 = vmatpush2.bf16.msra.mxu0 %v803
        %1021 = vmatprep.subr.bf16.mxu0 0
        %1022 = vmatpush2.bf16.msra.mxu0 %v802
        %1023 = vmatprep.subr.bf16.mxu0 0
        %1024 = vmatpush2.bf16.msra.mxu0 %v801
        %1025 = vmatprep.mubr.bf16.mxu0 %v480
        %1026 = vmatmul.mubr.bf16.gmra.mxu0 %v479
        %v1027 = vpop.f32.mrf.mxu0
        %v1028 = vadd.f32 %v988, %v1027
        %v1029 = vpop.f32.mrf.mxu0
        %v1030 = vpop.f32.mrf.mxu0
        %v1031 = vpop.f32.mrf.mxu0
        %1032 = vdwg.mxu0
        %v1033 = vtanh.pop %v1028
        %v1034 = vpack.c.bf16 %v1033, %v1033
        %v1035 = vld [vmem:[%s277] sm:$0xff]
        %v1036 = vld [vmem:[%s277 + $0x8] sm:$0xff]
        %v1037 = vld [vmem:[%s277 + $0x10] sm:$0xff]
        %v1038 = vld [vmem:[%s277 + $0x18] sm:$0xff]
        %v1039 = vld [vmem:[%s277 + $0x20] sm:$0xff]
        %v1040 = vld [vmem:[%s277 + $0x28] sm:$0xff]
        %v1041 = vld [vmem:[%s277 + $0x30] sm:$0xff]
        %v1042 = vld [vmem:[%s277 + $0x38] sm:$0xff]
        %v1043 = vld [vmem:[%s277 + $0x40] sm:$0xff]
        %v1044 = vld [vmem:[%s277 + $0x48] sm:$0xf]
        %v1045 = vld [vmem:[%s277 + $0x4c] sm:$0xff]
        %v1046 = vld [vmem:[%s277 + $0x54] sm:$0xff]
        %v1047 = vld [vmem:[%s277 + $0x5c] sm:$0xff]
        %v1048 = vld [vmem:[%s277 + $0x64] sm:$0xff]
        %v1049 = vld [vmem:[%s277 + $0x6c] sm:$0xff]
        %v1050 = vld [vmem:[%s277 + $0x74] sm:$0xff]
        %v1051 = vld [vmem:[%s277 + $0x7c] sm:$0xff]
        %v1052 = vld [vmem:[%s277 + $0x84] sm:$0xff]
        %v1053 = vld [vmem:[%s277 + $0x8c] sm:$0xff]
        %v1054 = vld [vmem:[%s277 + $0x94] sm:$0xf]
        %v1055 = vld [vmem:[%s277 + $0x98] sm:$0xff]
        %v1056 = vld [vmem:[%s277 + $0xa0] sm:$0xff]
        %v1057 = vld [vmem:[%s277 + $0xa8] sm:$0xff]
        %v1058 = vld [vmem:[%s277 + $0xb0] sm:$0xff]
        %v1059 = vld [vmem:[%s277 + $0xb8] sm:$0xff]
        %v1060 = vld [vmem:[%s277 + $0xc0] sm:$0xff]
        %v1061 = vld [vmem:[%s277 + $0xc8] sm:$0xff]
        %v1062 = vld [vmem:[%s277 + $0xd0] sm:$0xff]
        %v1063 = vld [vmem:[%s277 + $0xd8] sm:$0xff]
        %v1064 = vld [vmem:[%s277 + $0xe0] sm:$0xf]
        %v1065 = vld [vmem:[%s277 + $0xe4] sm:$0xff]
        %v1066 = vld [vmem:[%s277 + $0xec] sm:$0xff]
        %v1067 = vld [vmem:[%s277 + $0xf4] sm:$0xff]
        %v1068 = vld [vmem:[%s277 + $0xfc] sm:$0xff]
        %v1069 = vld [vmem:[%s277 + $0x104] sm:$0xff]
        %v1070 = vld [vmem:[%s277 + $0x10c] sm:$0xff]
        %v1071 = vld [vmem:[%s277 + $0x114] sm:$0xff]
        %v1072 = vld [vmem:[%s277 + $0x11c] sm:$0xff]
        %v1073 = vld [vmem:[%s277 + $0x124] sm:$0xff]
        %v1074 = vld [vmem:[%s277 + $0x12c] sm:$0xf]
        %v1075 = vld [vmem:[%s277 + $0x130] sm:$0xff]
        %v1076 = vld [vmem:[%s277 + $0x138] sm:$0xff]
        %v1077 = vld [vmem:[%s277 + $0x140] sm:$0xff]
        %v1078 = vld [vmem:[%s277 + $0x148] sm:$0xff]
        %v1079 = vld [vmem:[%s277 + $0x150] sm:$0xff]
        %v1080 = vld [vmem:[%s277 + $0x158] sm:$0xff]
        %v1081 = vld [vmem:[%s277 + $0x160] sm:$0xff]
        %v1082 = vld [vmem:[%s277 + $0x168] sm:$0xff]
        %v1083 = vld [vmem:[%s277 + $0x170] sm:$0xff]
        %v1084 = vld [vmem:[%s277 + $0x178] sm:$0xf]
        %v1085 = vld [vmem:[%s277 + $0x17c] sm:$0xff]
        %v1086 = vld [vmem:[%s277 + $0x184] sm:$0xff]
        %v1087 = vld [vmem:[%s277 + $0x18c] sm:$0xff]
        %v1088 = vld [vmem:[%s277 + $0x194] sm:$0xff]
        %v1089 = vld [vmem:[%s277 + $0x19c] sm:$0xff]
        %v1090 = vld [vmem:[%s277 + $0x1a4] sm:$0xff]
        %v1091 = vld [vmem:[%s277 + $0x1ac] sm:$0xff]
        %v1092 = vld [vmem:[%s277 + $0x1b4] sm:$0xff]
        %v1093 = vld [vmem:[%s277 + $0x1bc] sm:$0xff]
        %v1094 = vld [vmem:[%s277 + $0x1c4] sm:$0xf]
        %v1095 = vld [vmem:[%s277 + $0x1c8] sm:$0xff]
        %v1096 = vld [vmem:[%s277 + $0x1d0] sm:$0xff]
        %v1097 = vld [vmem:[%s277 + $0x1d8] sm:$0xff]
        %v1098 = vld [vmem:[%s277 + $0x1e0] sm:$0xff]
        %v1099 = vld [vmem:[%s277 + $0x1e8] sm:$0xff]
        %v1100 = vld [vmem:[%s277 + $0x1f0] sm:$0xff]
        %v1101 = vld [vmem:[%s277 + $0x1f8] sm:$0xff]
        %v1102 = vld [vmem:[%s277 + $0x200] sm:$0xff]
        %v1103 = vld [vmem:[%s277 + $0x208] sm:$0xff]
        %v1104 = vld [vmem:[%s277 + $0x210] sm:$0xf]
        %v1105 = vld [vmem:[%s277 + $0x214] sm:$0xff]
        %v1106 = vld [vmem:[%s277 + $0x21c] sm:$0xff]
        %v1107 = vld [vmem:[%s277 + $0x224] sm:$0xff]
        %v1108 = vld [vmem:[%s277 + $0x22c] sm:$0xff]
        %v1109 = vld [vmem:[%s277 + $0x234] sm:$0xff]
        %v1110 = vld [vmem:[%s277 + $0x23c] sm:$0xff]
        %v1111 = vld [vmem:[%s277 + $0x244] sm:$0xff]
        %v1112 = vld [vmem:[%s277 + $0x24c] sm:$0xff]
        %v1113 = vld [vmem:[%s277 + $0x254] sm:$0xff]
        %v1114 = vld [vmem:[%s277 + $0x25c] sm:$0xf]
        %v1115 = vld [vmem:[%s277 + $0x260] sm:$0xff]
        %v1116 = vld [vmem:[%s277 + $0x268] sm:$0xff]
        %v1117 = vld [vmem:[%s277 + $0x270] sm:$0xff]
        %v1118 = vld [vmem:[%s277 + $0x278] sm:$0xff]
        %v1119 = vld [vmem:[%s277 + $0x280] sm:$0xff]
        %v1120 = vld [vmem:[%s277 + $0x288] sm:$0xff]
        %v1121 = vld [vmem:[%s277 + $0x290] sm:$0xff]
        %v1122 = vld [vmem:[%s277 + $0x298] sm:$0xff]
        %v1123 = vld [vmem:[%s277 + $0x2a0] sm:$0xff]
        %v1124 = vld [vmem:[%s277 + $0x2a8] sm:$0xf]
        %v1125 = vld [vmem:[%s277 + $0x2ac] sm:$0xff]
        %v1126 = vld [vmem:[%s277 + $0x2b4] sm:$0xff]
        %v1127 = vld [vmem:[%s277 + $0x2bc] sm:$0xff]
        %v1128 = vld [vmem:[%s277 + $0x2c4] sm:$0xff]
        %v1129 = vld [vmem:[%s277 + $0x2cc] sm:$0xff]
        %v1130 = vld [vmem:[%s277 + $0x2d4] sm:$0xff]
        %v1131 = vld [vmem:[%s277 + $0x2dc] sm:$0xff]
        %v1132 = vld [vmem:[%s277 + $0x2e4] sm:$0xff]
        %v1133 = vld [vmem:[%s277 + $0x2ec] sm:$0xff]
        %v1134 = vld [vmem:[%s277 + $0x2f4] sm:$0xf]
        %v1135 = vld [vmem:[%s277 + $0x2f8] sm:$0xff]
        %v1136 = vld [vmem:[%s277 + $0x300] sm:$0xff]
        %v1137 = vld [vmem:[%s277 + $0x308] sm:$0xff]
        %v1138 = vld [vmem:[%s277 + $0x310] sm:$0xff]
        %v1139 = vld [vmem:[%s277 + $0x318] sm:$0xff]
        %v1140 = vld [vmem:[%s277 + $0x320] sm:$0xff]
        %v1141 = vld [vmem:[%s277 + $0x328] sm:$0xff]
        %v1142 = vld [vmem:[%s277 + $0x330] sm:$0xff]
        %v1143 = vld [vmem:[%s277 + $0x338] sm:$0xff]
        %v1144 = vld [vmem:[%s277 + $0x340] sm:$0xf]
        %v1145 = vld [vmem:[%s277 + $0x344] sm:$0xff]
        %v1146 = vld [vmem:[%s277 + $0x34c] sm:$0xff]
        %v1147 = vld [vmem:[%s277 + $0x354] sm:$0xff]
        %v1148 = vld [vmem:[%s277 + $0x35c] sm:$0xff]
        %v1149 = vld [vmem:[%s277 + $0x364] sm:$0xff]
        %v1150 = vld [vmem:[%s277 + $0x36c] sm:$0xff]
        %v1151 = vld [vmem:[%s277 + $0x374] sm:$0xff]
        %v1152 = vld [vmem:[%s277 + $0x37c] sm:$0xff]
        %v1153 = vld [vmem:[%s277 + $0x384] sm:$0xff]
        %v1154 = vld [vmem:[%s277 + $0x38c] sm:$0xf]
        %v1155 = vld [vmem:[%s277 + $0x390] sm:$0xff]
        %v1156 = vld [vmem:[%s277 + $0x398] sm:$0xff]
        %v1157 = vld [vmem:[%s277 + $0x3a0] sm:$0xff]
        %v1158 = vld [vmem:[%s277 + $0x3a8] sm:$0xff]
        %v1159 = vld [vmem:[%s277 + $0x3b0] sm:$0xff]
        %v1160 = vld [vmem:[%s277 + $0x3b8] sm:$0xff]
        %v1161 = vld [vmem:[%s277 + $0x3c0] sm:$0xff]
        %v1162 = vld [vmem:[%s277 + $0x3c8] sm:$0xff]
        %v1163 = vld [vmem:[%s277 + $0x3d0] sm:$0xff]
        %v1164 = vld [vmem:[%s277 + $0x3d8] sm:$0xf]
        %v1165 = vld [vmem:[%s277 + $0x3dc] sm:$0xff]
        %v1166 = vld [vmem:[%s277 + $0x3e4] sm:$0xff]
        %v1167 = vld [vmem:[%s277 + $0x3ec] sm:$0xff]
        %v1168 = vld [vmem:[%s277 + $0x3f4] sm:$0xff]
        %v1169 = vld [vmem:[%s277 + $0x3fc] sm:$0xff]
        %v1170 = vld [vmem:[%s277 + $0x404] sm:$0xff]
        %v1171 = vld [vmem:[%s277 + $0x40c] sm:$0xff]
        %v1172 = vld [vmem:[%s277 + $0x414] sm:$0xff]
        %v1173 = vld [vmem:[%s277 + $0x41c] sm:$0xff]
        %v1174 = vld [vmem:[%s277 + $0x424] sm:$0xf]
        %v1175 = vld [vmem:[%s277 + $0x428] sm:$0xff]
        %v1176 = vld [vmem:[%s277 + $0x430] sm:$0xff]
        %v1177 = vld [vmem:[%s277 + $0x438] sm:$0xff]
        %v1178 = vld [vmem:[%s277 + $0x440] sm:$0xff]
        %v1179 = vld [vmem:[%s277 + $0x448] sm:$0xff]
        %v1180 = vld [vmem:[%s277 + $0x450] sm:$0xff]
        %v1181 = vld [vmem:[%s277 + $0x458] sm:$0xff]
        %v1182 = vld [vmem:[%s277 + $0x460] sm:$0xff]
        %v1183 = vld [vmem:[%s277 + $0x468] sm:$0xff]
        %v1184 = vld [vmem:[%s277 + $0x470] sm:$0xf]
        %v1185 = vld [vmem:[%s277 + $0x474] sm:$0xff]
        %v1186 = vld [vmem:[%s277 + $0x47c] sm:$0xff]
        %v1187 = vld [vmem:[%s277 + $0x484] sm:$0xff]
        %v1188 = vld [vmem:[%s277 + $0x48c] sm:$0xff]
        %v1189 = vld [vmem:[%s277 + $0x494] sm:$0xff]
        %v1190 = vld [vmem:[%s277 + $0x49c] sm:$0xff]
        %v1191 = vld [vmem:[%s277 + $0x4a4] sm:$0xff]
        %v1192 = vld [vmem:[%s277 + $0x4ac] sm:$0xff]
        %v1193 = vld [vmem:[%s277 + $0x4b4] sm:$0xff]
        %v1194 = vld [vmem:[%s277 + $0x4bc] sm:$0xf]
        %v1195 = vld [vmem:[%s286] sm:$0xff]
        %v1196 = vld [vmem:[%s286 + $0x8] sm:$0xff]
        %v1197 = vld [vmem:[%s286 + $0x10] sm:$0x7]
        %v1201 = vlaneseq
        %v1202 = vshrl.u32 %v1201, 7
        %v1203 = vsub.s32 0, %v1202
        %v1204 = vrot.slane %v1195, %v1203
        %v1205 = vlaneseq
        %v1206 = vshrl.u32 %v1205, 7
        %v1207 = vsub.s32 1, %v1206
        %v1208 = vrot.slane %v1195, %v1207
        %v1209 = vlaneseq
        %v1210 = vshrl.u32 %v1209, 7
        %v1211 = vsub.s32 2, %v1210
        %v1212 = vrot.slane %v1195, %v1211
        %v1213 = vlaneseq
        %v1214 = vshrl.u32 %v1213, 7
        %v1215 = vsub.s32 3, %v1214
        %v1216 = vrot.slane %v1195, %v1215
        %v1217 = vlaneseq
        %v1218 = vshrl.u32 %v1217, 7
        %v1219 = vsub.s32 4, %v1218
        %v1220 = vrot.slane %v1195, %v1219
        %v1221 = vlaneseq
        %v1222 = vshrl.u32 %v1221, 7
        %v1223 = vsub.s32 5, %v1222
        %v1224 = vrot.slane %v1195, %v1223
        %v1225 = vlaneseq
        %v1226 = vshrl.u32 %v1225, 7
        %v1227 = vsub.s32 6, %v1226
        %v1228 = vrot.slane %v1195, %v1227
        %v1229 = vlaneseq
        %v1230 = vshrl.u32 %v1229, 7
        %v1231 = vsub.s32 7, %v1230
        %v1232 = vrot.slane %v1195, %v1231
        %v1233 = vlaneseq
        %v1234 = vshrl.u32 %v1233, 7
        %v1235 = vsub.s32 0, %v1234
        %v1236 = vrot.slane %v1196, %v1235
        %v1237 = vlaneseq
        %v1238 = vshrl.u32 %v1237, 7
        %v1239 = vsub.s32 1, %v1238
        %v1240 = vrot.slane %v1196, %v1239
        %v1241 = vlaneseq
        %v1242 = vshrl.u32 %v1241, 7
        %v1243 = vsub.s32 2, %v1242
        %v1244 = vrot.slane %v1196, %v1243
        %v1245 = vlaneseq
        %v1246 = vshrl.u32 %v1245, 7
        %v1247 = vsub.s32 3, %v1246
        %v1248 = vrot.slane %v1196, %v1247
        %v1249 = vlaneseq
        %v1250 = vshrl.u32 %v1249, 7
        %v1251 = vsub.s32 4, %v1250
        %v1252 = vrot.slane %v1196, %v1251
        %v1253 = vlaneseq
        %v1254 = vshrl.u32 %v1253, 7
        %v1255 = vsub.s32 5, %v1254
        %v1256 = vrot.slane %v1196, %v1255
        %v1257 = vlaneseq
        %v1258 = vshrl.u32 %v1257, 7
        %v1259 = vsub.s32 6, %v1258
        %v1260 = vrot.slane %v1196, %v1259
        %v1261 = vlaneseq
        %v1262 = vshrl.u32 %v1261, 7
        %v1263 = vsub.s32 7, %v1262
        %v1264 = vrot.slane %v1196, %v1263
        %v1265 = vlaneseq
        %v1266 = vshrl.u32 %v1265, 7
        %v1267 = vsub.s32 0, %v1266
        %v1268 = vrot.slane %v1197, %v1267
        %v1269 = vlaneseq
        %v1270 = vshrl.u32 %v1269, 7
        %v1271 = vsub.s32 1, %v1270
        %v1272 = vrot.slane %v1197, %v1271
        %v1273 = vlaneseq
        %v1274 = vshrl.u32 %v1273, 7
        %v1275 = vsub.s32 2, %v1274
        %v1276 = vrot.slane %v1197, %v1275
        %v1456 = vunpack.c.l.b16 %v1035
        %v1457 = vunpack.c.h.b16 %v1035
        %v1458 = vunpack.c.l.b16 %v1036
        %v1459 = vunpack.c.h.b16 %v1036
        %v1460 = vunpack.c.l.b16 %v1037
        %v1461 = vunpack.c.h.b16 %v1037
        %v1462 = vunpack.c.l.b16 %v1038
        %v1463 = vunpack.c.h.b16 %v1038
        %v1464 = vunpack.c.l.b16 %v1039
        %v1465 = vunpack.c.h.b16 %v1039
        %v1466 = vunpack.c.l.b16 %v1040
        %v1467 = vunpack.c.h.b16 %v1040
        %v1468 = vunpack.c.l.b16 %v1041
        %v1469 = vunpack.c.h.b16 %v1041
        %v1470 = vunpack.c.l.b16 %v1042
        %v1471 = vunpack.c.h.b16 %v1042
        %v1472 = vunpack.c.l.b16 %v1043
        %v1473 = vunpack.c.h.b16 %v1043
        %v1474 = vunpack.c.l.b16 %v1044
        %v1475 = vunpack.c.l.b16 %v1045
        %v1476 = vunpack.c.h.b16 %v1045
        %v1477 = vunpack.c.l.b16 %v1046
        %v1478 = vunpack.c.h.b16 %v1046
        %v1479 = vunpack.c.l.b16 %v1047
        %v1480 = vunpack.c.h.b16 %v1047
        %v1481 = vunpack.c.l.b16 %v1048
        %v1482 = vunpack.c.h.b16 %v1048
        %v1483 = vunpack.c.l.b16 %v1049
        %v1484 = vunpack.c.h.b16 %v1049
        %v1485 = vunpack.c.l.b16 %v1050
        %v1486 = vunpack.c.h.b16 %v1050
        %v1487 = vunpack.c.l.b16 %v1051
        %v1488 = vunpack.c.h.b16 %v1051
        %v1489 = vunpack.c.l.b16 %v1052
        %v1490 = vunpack.c.h.b16 %v1052
        %v1491 = vunpack.c.l.b16 %v1053
        %v1492 = vunpack.c.h.b16 %v1053
        %v1493 = vunpack.c.l.b16 %v1054
        %v1494 = vunpack.c.l.b16 %v1055
        %v1495 = vunpack.c.h.b16 %v1055
        %v1496 = vunpack.c.l.b16 %v1056
        %v1497 = vunpack.c.h.b16 %v1056
        %v1498 = vunpack.c.l.b16 %v1057
        %v1499 = vunpack.c.h.b16 %v1057
        %v1500 = vunpack.c.l.b16 %v1058
        %v1501 = vunpack.c.h.b16 %v1058
        %v1502 = vunpack.c.l.b16 %v1059
        %v1503 = vunpack.c.h.b16 %v1059
        %v1504 = vunpack.c.l.b16 %v1060
        %v1505 = vunpack.c.h.b16 %v1060
        %v1506 = vunpack.c.l.b16 %v1061
        %v1507 = vunpack.c.h.b16 %v1061
        %v1508 = vunpack.c.l.b16 %v1062
        %v1509 = vunpack.c.h.b16 %v1062
        %v1510 = vunpack.c.l.b16 %v1063
        %v1511 = vunpack.c.h.b16 %v1063
        %v1512 = vunpack.c.l.b16 %v1064
        %v1513 = vunpack.c.l.b16 %v1065
        %v1514 = vunpack.c.h.b16 %v1065
        %v1515 = vunpack.c.l.b16 %v1066
        %v1516 = vunpack.c.h.b16 %v1066
        %v1517 = vunpack.c.l.b16 %v1067
        %v1518 = vunpack.c.h.b16 %v1067
        %v1519 = vunpack.c.l.b16 %v1068
        %v1520 = vunpack.c.h.b16 %v1068
        %v1521 = vunpack.c.l.b16 %v1069
        %v1522 = vunpack.c.h.b16 %v1069
        %v1523 = vunpack.c.l.b16 %v1070
        %v1524 = vunpack.c.h.b16 %v1070
        %v1525 = vunpack.c.l.b16 %v1071
        %v1526 = vunpack.c.h.b16 %v1071
        %v1527 = vunpack.c.l.b16 %v1072
        %v1528 = vunpack.c.h.b16 %v1072
        %v1529 = vunpack.c.l.b16 %v1073
        %v1530 = vunpack.c.h.b16 %v1073
        %v1531 = vunpack.c.l.b16 %v1074
        %v1532 = vunpack.c.l.b16 %v1075
        %v1533 = vunpack.c.h.b16 %v1075
        %v1534 = vunpack.c.l.b16 %v1076
        %v1535 = vunpack.c.h.b16 %v1076
        %v1536 = vunpack.c.l.b16 %v1077
        %v1537 = vunpack.c.h.b16 %v1077
        %v1538 = vunpack.c.l.b16 %v1078
        %v1539 = vunpack.c.h.b16 %v1078
        %v1540 = vunpack.c.l.b16 %v1079
        %v1541 = vunpack.c.h.b16 %v1079
        %v1542 = vunpack.c.l.b16 %v1080
        %v1543 = vunpack.c.h.b16 %v1080
        %v1544 = vunpack.c.l.b16 %v1081
        %v1545 = vunpack.c.h.b16 %v1081
        %v1546 = vunpack.c.l.b16 %v1082
        %v1547 = vunpack.c.h.b16 %v1082
        %v1548 = vunpack.c.l.b16 %v1083
        %v1549 = vunpack.c.h.b16 %v1083
        %v1550 = vunpack.c.l.b16 %v1084
        %v1551 = vunpack.c.l.b16 %v1085
        %v1552 = vunpack.c.h.b16 %v1085
        %v1553 = vunpack.c.l.b16 %v1086
        %v1554 = vunpack.c.h.b16 %v1086
        %v1555 = vunpack.c.l.b16 %v1087
        %v1556 = vunpack.c.h.b16 %v1087
        %v1557 = vunpack.c.l.b16 %v1088
        %v1558 = vunpack.c.h.b16 %v1088
        %v1559 = vunpack.c.l.b16 %v1089
        %v1560 = vunpack.c.h.b16 %v1089
        %v1561 = vunpack.c.l.b16 %v1090
        %v1562 = vunpack.c.h.b16 %v1090
        %v1563 = vunpack.c.l.b16 %v1091
        %v1564 = vunpack.c.h.b16 %v1091
        %v1565 = vunpack.c.l.b16 %v1092
        %v1566 = vunpack.c.h.b16 %v1092
        %v1567 = vunpack.c.l.b16 %v1093
        %v1568 = vunpack.c.h.b16 %v1093
        %v1569 = vunpack.c.l.b16 %v1094
        %v1570 = vunpack.c.l.b16 %v1095
        %v1571 = vunpack.c.h.b16 %v1095
        %v1572 = vunpack.c.l.b16 %v1096
        %v1573 = vunpack.c.h.b16 %v1096
        %v1574 = vunpack.c.l.b16 %v1097
        %v1575 = vunpack.c.h.b16 %v1097
        %v1576 = vunpack.c.l.b16 %v1098
        %v1577 = vunpack.c.h.b16 %v1098
        %v1578 = vunpack.c.l.b16 %v1099
        %v1579 = vunpack.c.h.b16 %v1099
        %v1580 = vunpack.c.l.b16 %v1100
        %v1581 = vunpack.c.h.b16 %v1100
        %v1582 = vunpack.c.l.b16 %v1101
        %v1583 = vunpack.c.h.b16 %v1101
        %v1584 = vunpack.c.l.b16 %v1102
        %v1585 = vunpack.c.h.b16 %v1102
        %v1586 = vunpack.c.l.b16 %v1103
        %v1587 = vunpack.c.h.b16 %v1103
        %v1588 = vunpack.c.l.b16 %v1104
        %v1589 = vunpack.c.l.b16 %v1105
        %v1590 = vunpack.c.h.b16 %v1105
        %v1591 = vunpack.c.l.b16 %v1106
        %v1592 = vunpack.c.h.b16 %v1106
        %v1593 = vunpack.c.l.b16 %v1107
        %v1594 = vunpack.c.h.b16 %v1107
        %v1595 = vunpack.c.l.b16 %v1108
        %v1596 = vunpack.c.h.b16 %v1108
        %v1597 = vunpack.c.l.b16 %v1109
        %v1598 = vunpack.c.h.b16 %v1109
        %v1599 = vunpack.c.l.b16 %v1110
        %v1600 = vunpack.c.h.b16 %v1110
        %v1601 = vunpack.c.l.b16 %v1111
        %v1602 = vunpack.c.h.b16 %v1111
        %v1603 = vunpack.c.l.b16 %v1112
        %v1604 = vunpack.c.h.b16 %v1112
        %v1605 = vunpack.c.l.b16 %v1113
        %v1606 = vunpack.c.h.b16 %v1113
        %v1607 = vunpack.c.l.b16 %v1114
        %v1608 = vunpack.c.l.b16 %v1115
        %v1609 = vunpack.c.h.b16 %v1115
        %v1610 = vunpack.c.l.b16 %v1116
        %v1611 = vunpack.c.h.b16 %v1116
        %v1612 = vunpack.c.l.b16 %v1117
        %v1613 = vunpack.c.h.b16 %v1117
        %v1614 = vunpack.c.l.b16 %v1118
        %v1615 = vunpack.c.h.b16 %v1118
        %v1616 = vunpack.c.l.b16 %v1119
        %v1617 = vunpack.c.h.b16 %v1119
        %v1618 = vunpack.c.l.b16 %v1120
        %v1619 = vunpack.c.h.b16 %v1120
        %v1620 = vunpack.c.l.b16 %v1121
        %v1621 = vunpack.c.h.b16 %v1121
        %v1622 = vunpack.c.l.b16 %v1122
        %v1623 = vunpack.c.h.b16 %v1122
        %v1624 = vunpack.c.l.b16 %v1123
        %v1625 = vunpack.c.h.b16 %v1123
        %v1626 = vunpack.c.l.b16 %v1124
        %v1627 = vunpack.c.l.b16 %v1125
        %v1628 = vunpack.c.h.b16 %v1125
        %v1629 = vunpack.c.l.b16 %v1126
        %v1630 = vunpack.c.h.b16 %v1126
        %v1631 = vunpack.c.l.b16 %v1127
        %v1632 = vunpack.c.h.b16 %v1127
        %v1633 = vunpack.c.l.b16 %v1128
        %v1634 = vunpack.c.h.b16 %v1128
        %v1635 = vunpack.c.l.b16 %v1129
        %v1636 = vunpack.c.h.b16 %v1129
        %v1637 = vunpack.c.l.b16 %v1130
        %v1638 = vunpack.c.h.b16 %v1130
        %v1639 = vunpack.c.l.b16 %v1131
        %v1640 = vunpack.c.h.b16 %v1131
        %v1641 = vunpack.c.l.b16 %v1132
        %v1642 = vunpack.c.h.b16 %v1132
        %v1643 = vunpack.c.l.b16 %v1133
        %v1644 = vunpack.c.h.b16 %v1133
        %v1645 = vunpack.c.l.b16 %v1134
        %v1646 = vunpack.c.l.b16 %v1135
        %v1647 = vunpack.c.h.b16 %v1135
        %v1648 = vunpack.c.l.b16 %v1136
        %v1649 = vunpack.c.h.b16 %v1136
        %v1650 = vunpack.c.l.b16 %v1137
        %v1651 = vunpack.c.h.b16 %v1137
        %v1652 = vunpack.c.l.b16 %v1138
        %v1653 = vunpack.c.h.b16 %v1138
        %v1654 = vunpack.c.l.b16 %v1139
        %v1655 = vunpack.c.h.b16 %v1139
        %v1656 = vunpack.c.l.b16 %v1140
        %v1657 = vunpack.c.h.b16 %v1140
        %v1658 = vunpack.c.l.b16 %v1141
        %v1659 = vunpack.c.h.b16 %v1141
        %v1660 = vunpack.c.l.b16 %v1142
        %v1661 = vunpack.c.h.b16 %v1142
        %v1662 = vunpack.c.l.b16 %v1143
        %v1663 = vunpack.c.h.b16 %v1143
        %v1664 = vunpack.c.l.b16 %v1144
        %v1665 = vunpack.c.l.b16 %v1145
        %v1666 = vunpack.c.h.b16 %v1145
        %v1667 = vunpack.c.l.b16 %v1146
        %v1668 = vunpack.c.h.b16 %v1146
        %v1669 = vunpack.c.l.b16 %v1147
        %v1670 = vunpack.c.h.b16 %v1147
        %v1671 = vunpack.c.l.b16 %v1148
        %v1672 = vunpack.c.h.b16 %v1148
        %v1673 = vunpack.c.l.b16 %v1149
        %v1674 = vunpack.c.h.b16 %v1149
        %v1675 = vunpack.c.l.b16 %v1150
        %v1676 = vunpack.c.h.b16 %v1150
        %v1677 = vunpack.c.l.b16 %v1151
        %v1678 = vunpack.c.h.b16 %v1151
        %v1679 = vunpack.c.l.b16 %v1152
        %v1680 = vunpack.c.h.b16 %v1152
        %v1681 = vunpack.c.l.b16 %v1153
        %v1682 = vunpack.c.h.b16 %v1153
        %v1683 = vunpack.c.l.b16 %v1154
        %v1684 = vunpack.c.l.b16 %v1155
        %v1685 = vunpack.c.h.b16 %v1155
        %v1686 = vunpack.c.l.b16 %v1156
        %v1687 = vunpack.c.h.b16 %v1156
        %v1688 = vunpack.c.l.b16 %v1157
        %v1689 = vunpack.c.h.b16 %v1157
        %v1690 = vunpack.c.l.b16 %v1158
        %v1691 = vunpack.c.h.b16 %v1158
        %v1692 = vunpack.c.l.b16 %v1159
        %v1693 = vunpack.c.h.b16 %v1159
        %v1694 = vunpack.c.l.b16 %v1160
        %v1695 = vunpack.c.h.b16 %v1160
        %v1696 = vunpack.c.l.b16 %v1161
        %v1697 = vunpack.c.h.b16 %v1161
        %v1698 = vunpack.c.l.b16 %v1162
        %v1699 = vunpack.c.h.b16 %v1162
        %v1700 = vunpack.c.l.b16 %v1163
        %v1701 = vunpack.c.h.b16 %v1163
        %v1702 = vunpack.c.l.b16 %v1164
        %v1703 = vunpack.c.l.b16 %v1165
        %v1704 = vunpack.c.h.b16 %v1165
        %v1705 = vunpack.c.l.b16 %v1166
        %v1706 = vunpack.c.h.b16 %v1166
        %v1707 = vunpack.c.l.b16 %v1167
        %v1708 = vunpack.c.h.b16 %v1167
        %v1709 = vunpack.c.l.b16 %v1168
        %v1710 = vunpack.c.h.b16 %v1168
        %v1711 = vunpack.c.l.b16 %v1169
        %v1712 = vunpack.c.h.b16 %v1169
        %v1713 = vunpack.c.l.b16 %v1170
        %v1714 = vunpack.c.h.b16 %v1170
        %v1715 = vunpack.c.l.b16 %v1171
        %v1716 = vunpack.c.h.b16 %v1171
        %v1717 = vunpack.c.l.b16 %v1172
        %v1718 = vunpack.c.h.b16 %v1172
        %v1719 = vunpack.c.l.b16 %v1173
        %v1720 = vunpack.c.h.b16 %v1173
        %v1721 = vunpack.c.l.b16 %v1174
        %v1722 = vunpack.c.l.b16 %v1175
        %v1723 = vunpack.c.h.b16 %v1175
        %v1724 = vunpack.c.l.b16 %v1176
        %v1725 = vunpack.c.h.b16 %v1176
        %v1726 = vunpack.c.l.b16 %v1177
        %v1727 = vunpack.c.h.b16 %v1177
        %v1728 = vunpack.c.l.b16 %v1178
        %v1729 = vunpack.c.h.b16 %v1178
        %v1730 = vunpack.c.l.b16 %v1179
        %v1731 = vunpack.c.h.b16 %v1179
        %v1732 = vunpack.c.l.b16 %v1180
        %v1733 = vunpack.c.h.b16 %v1180
        %v1734 = vunpack.c.l.b16 %v1181
        %v1735 = vunpack.c.h.b16 %v1181
        %v1736 = vunpack.c.l.b16 %v1182
        %v1737 = vunpack.c.h.b16 %v1182
        %v1738 = vunpack.c.l.b16 %v1183
        %v1739 = vunpack.c.h.b16 %v1183
        %v1740 = vunpack.c.l.b16 %v1184
        %v1741 = vunpack.c.l.b16 %v1185
        %v1742 = vunpack.c.h.b16 %v1185
        %v1743 = vunpack.c.l.b16 %v1186
        %v1744 = vunpack.c.h.b16 %v1186
        %v1745 = vunpack.c.l.b16 %v1187
        %v1746 = vunpack.c.h.b16 %v1187
        %v1747 = vunpack.c.l.b16 %v1188
        %v1748 = vunpack.c.h.b16 %v1188
        %v1749 = vunpack.c.l.b16 %v1189
        %v1750 = vunpack.c.h.b16 %v1189
        %v1751 = vunpack.c.l.b16 %v1190
        %v1752 = vunpack.c.h.b16 %v1190
        %v1753 = vunpack.c.l.b16 %v1191
        %v1754 = vunpack.c.h.b16 %v1191
        %v1755 = vunpack.c.l.b16 %v1192
        %v1756 = vunpack.c.h.b16 %v1192
        %v1757 = vunpack.c.l.b16 %v1193
        %v1758 = vunpack.c.h.b16 %v1193
        %v1759 = vunpack.c.l.b16 %v1194
        %v1760 = vpack.c.b16 %v1475, %v1456
        %v1761 = vpack.c.b16 %v1476, %v1457
        %v1762 = vpack.c.b16 %v1477, %v1458
        %v1763 = vpack.c.b16 %v1478, %v1459
        %v1764 = vpack.c.b16 %v1479, %v1460
        %v1765 = vpack.c.b16 %v1480, %v1461
        %v1766 = vpack.c.b16 %v1481, %v1462
        %v1767 = vpack.c.b16 %v1482, %v1463
        %v1768 = vpack.c.b16 %v1483, %v1464
        %v1769 = vpack.c.b16 %v1484, %v1465
        %v1770 = vpack.c.b16 %v1485, %v1466
        %v1771 = vpack.c.b16 %v1486, %v1467
        %v1772 = vpack.c.b16 %v1487, %v1468
        %v1773 = vpack.c.b16 %v1488, %v1469
        %v1774 = vpack.c.b16 %v1489, %v1470
        %v1775 = vpack.c.b16 %v1490, %v1471
        %v1776 = vpack.c.b16 %v1491, %v1472
        %v1777 = vpack.c.b16 %v1492, %v1473
        %v1778 = vpack.c.b16 %v1493, %v1474
        %v1779 = vpack.c.b16 %v1513, %v1494
        %v1780 = vpack.c.b16 %v1514, %v1495
        %v1781 = vpack.c.b16 %v1515, %v1496
        %v1782 = vpack.c.b16 %v1516, %v1497
        %v1783 = vpack.c.b16 %v1517, %v1498
        %v1784 = vpack.c.b16 %v1518, %v1499
        %v1785 = vpack.c.b16 %v1519, %v1500
        %v1786 = vpack.c.b16 %v1520, %v1501
        %v1787 = vpack.c.b16 %v1521, %v1502
        %v1788 = vpack.c.b16 %v1522, %v1503
        %v1789 = vpack.c.b16 %v1523, %v1504
        %v1790 = vpack.c.b16 %v1524, %v1505
        %v1791 = vpack.c.b16 %v1525, %v1506
        %v1792 = vpack.c.b16 %v1526, %v1507
        %v1793 = vpack.c.b16 %v1527, %v1508
        %v1794 = vpack.c.b16 %v1528, %v1509
        %v1795 = vpack.c.b16 %v1529, %v1510
        %v1796 = vpack.c.b16 %v1530, %v1511
        %v1797 = vpack.c.b16 %v1531, %v1512
        %v1798 = vpack.c.b16 %v1551, %v1532
        %v1799 = vpack.c.b16 %v1552, %v1533
        %v1800 = vpack.c.b16 %v1553, %v1534
        %v1801 = vpack.c.b16 %v1554, %v1535
        %v1802 = vpack.c.b16 %v1555, %v1536
        %v1803 = vpack.c.b16 %v1556, %v1537
        %v1804 = vpack.c.b16 %v1557, %v1538
        %v1805 = vpack.c.b16 %v1558, %v1539
        %v1806 = vpack.c.b16 %v1559, %v1540
        %v1807 = vpack.c.b16 %v1560, %v1541
        %v1808 = vpack.c.b16 %v1561, %v1542
        %v1809 = vpack.c.b16 %v1562, %v1543
        %v1810 = vpack.c.b16 %v1563, %v1544
        %v1811 = vpack.c.b16 %v1564, %v1545
        %v1812 = vpack.c.b16 %v1565, %v1546
        %v1813 = vpack.c.b16 %v1566, %v1547
        %v1814 = vpack.c.b16 %v1567, %v1548
        %v1815 = vpack.c.b16 %v1568, %v1549
        %v1816 = vpack.c.b16 %v1569, %v1550
        %v1817 = vpack.c.b16 %v1589, %v1570
        %v1818 = vpack.c.b16 %v1590, %v1571
        %v1819 = vpack.c.b16 %v1591, %v1572
        %v1820 = vpack.c.b16 %v1592, %v1573
        %v1821 = vpack.c.b16 %v1593, %v1574
        %v1822 = vpack.c.b16 %v1594, %v1575
        %v1823 = vpack.c.b16 %v1595, %v1576
        %v1824 = vpack.c.b16 %v1596, %v1577
        %v1825 = vpack.c.b16 %v1597, %v1578
        %v1826 = vpack.c.b16 %v1598, %v1579
        %v1827 = vpack.c.b16 %v1599, %v1580
        %v1828 = vpack.c.b16 %v1600, %v1581
        %v1829 = vpack.c.b16 %v1601, %v1582
        %v1830 = vpack.c.b16 %v1602, %v1583
        %v1831 = vpack.c.b16 %v1603, %v1584
        %v1832 = vpack.c.b16 %v1604, %v1585
        %v1833 = vpack.c.b16 %v1605, %v1586
        %v1834 = vpack.c.b16 %v1606, %v1587
        %v1835 = vpack.c.b16 %v1607, %v1588
        %v1836 = vpack.c.b16 %v1627, %v1608
        %v1837 = vpack.c.b16 %v1628, %v1609
        %v1838 = vpack.c.b16 %v1629, %v1610
        %v1839 = vpack.c.b16 %v1630, %v1611
        %v1840 = vpack.c.b16 %v1631, %v1612
        %v1841 = vpack.c.b16 %v1632, %v1613
        %v1842 = vpack.c.b16 %v1633, %v1614
        %v1843 = vpack.c.b16 %v1634, %v1615
        %v1844 = vpack.c.b16 %v1635, %v1616
        %v1845 = vpack.c.b16 %v1636, %v1617
        %v1846 = vpack.c.b16 %v1637, %v1618
        %v1847 = vpack.c.b16 %v1638, %v1619
        %v1848 = vpack.c.b16 %v1639, %v1620
        %v1849 = vpack.c.b16 %v1640, %v1621
        %v1850 = vpack.c.b16 %v1641, %v1622
        %v1851 = vpack.c.b16 %v1642, %v1623
        %v1852 = vpack.c.b16 %v1643, %v1624
        %v1853 = vpack.c.b16 %v1644, %v1625
        %v1854 = vpack.c.b16 %v1645, %v1626
        %v1855 = vpack.c.b16 %v1665, %v1646
        %v1856 = vpack.c.b16 %v1666, %v1647
        %v1857 = vpack.c.b16 %v1667, %v1648
        %v1858 = vpack.c.b16 %v1668, %v1649
        %v1859 = vpack.c.b16 %v1669, %v1650
        %v1860 = vpack.c.b16 %v1670, %v1651
        %v1861 = vpack.c.b16 %v1671, %v1652
        %v1862 = vpack.c.b16 %v1672, %v1653
        %v1863 = vpack.c.b16 %v1673, %v1654
        %v1864 = vpack.c.b16 %v1674, %v1655
        %v1865 = vpack.c.b16 %v1675, %v1656
        %v1866 = vpack.c.b16 %v1676, %v1657
        %v1867 = vpack.c.b16 %v1677, %v1658
        %v1868 = vpack.c.b16 %v1678, %v1659
        %v1869 = vpack.c.b16 %v1679, %v1660
        %v1870 = vpack.c.b16 %v1680, %v1661
        %v1871 = vpack.c.b16 %v1681, %v1662
        %v1872 = vpack.c.b16 %v1682, %v1663
        %v1873 = vpack.c.b16 %v1683, %v1664
        %v1874 = vpack.c.b16 %v1703, %v1684
        %v1875 = vpack.c.b16 %v1704, %v1685
        %v1876 = vpack.c.b16 %v1705, %v1686
        %v1877 = vpack.c.b16 %v1706, %v1687
        %v1878 = vpack.c.b16 %v1707, %v1688
        %v1879 = vpack.c.b16 %v1708, %v1689
        %v1880 = vpack.c.b16 %v1709, %v1690
        %v1881 = vpack.c.b16 %v1710, %v1691
        %v1882 = vpack.c.b16 %v1711, %v1692
        %v1883 = vpack.c.b16 %v1712, %v1693
        %v1884 = vpack.c.b16 %v1713, %v1694
        %v1885 = vpack.c.b16 %v1714, %v1695
        %v1886 = vpack.c.b16 %v1715, %v1696
        %v1887 = vpack.c.b16 %v1716, %v1697
        %v1888 = vpack.c.b16 %v1717, %v1698
        %v1889 = vpack.c.b16 %v1718, %v1699
        %v1890 = vpack.c.b16 %v1719, %v1700
        %v1891 = vpack.c.b16 %v1720, %v1701
        %v1892 = vpack.c.b16 %v1721, %v1702
        %v1893 = vpack.c.b16 %v1741, %v1722
        %v1894 = vpack.c.b16 %v1742, %v1723
        %v1895 = vpack.c.b16 %v1743, %v1724
        %v1896 = vpack.c.b16 %v1744, %v1725
        %v1897 = vpack.c.b16 %v1745, %v1726
        %v1898 = vpack.c.b16 %v1746, %v1727
        %v1899 = vpack.c.b16 %v1747, %v1728
        %v1900 = vpack.c.b16 %v1748, %v1729
        %v1901 = vpack.c.b16 %v1749, %v1730
        %v1902 = vpack.c.b16 %v1750, %v1731
        %v1903 = vpack.c.b16 %v1751, %v1732
        %v1904 = vpack.c.b16 %v1752, %v1733
        %v1905 = vpack.c.b16 %v1753, %v1734
        %v1906 = vpack.c.b16 %v1754, %v1735
        %v1907 = vpack.c.b16 %v1755, %v1736
        %v1908 = vpack.c.b16 %v1756, %v1737
        %v1909 = vpack.c.b16 %v1757, %v1738
        %v1910 = vpack.c.b16 %v1758, %v1739
        %v1911 = vpack.c.b16 %v1759, %v1740
        %2064 = vmatprep.subr.bf16.mxu0 %v1894
        %2065 = vmatpush1.bf16.msra.mxu0 %v1893
        %2066 = vmatprep.subr.bf16.mxu0 %v1875
        %2067 = vmatpush1.bf16.msra.mxu0 %v1874
        %2068 = vmatprep.subr.bf16.mxu0 %v1856
        %2069 = vmatpush1.bf16.msra.mxu0 %v1855
        %2070 = vmatprep.subr.bf16.mxu0 %v1837
        %2071 = vmatpush1.bf16.msra.mxu0 %v1836
        %2072 = vmatprep.subr.bf16.mxu0 %v1818
        %2073 = vmatpush1.bf16.msra.mxu0 %v1817
        %2074 = vmatprep.subr.bf16.mxu0 %v1799
        %2075 = vmatpush1.bf16.msra.mxu0 %v1798
        %2076 = vmatprep.subr.bf16.mxu0 %v1780
        %2077 = vmatpush1.bf16.msra.mxu0 %v1779
        %2078 = vmatprep.subr.bf16.mxu0 %v1761
        %2079 = vmatpush1.bf16.msra.mxu0 %v1760
        %2080 = vmatprep.subr.bf16.mxu0 0
        %2081 = vmatpush2.bf16.msra.mxu0 0
        %2082 = vmatprep.subr.bf16.mxu0 0
        %2083 = vmatpush2.bf16.msra.mxu0 0
        %2084 = vmatprep.subr.bf16.mxu0 0
        %2085 = vmatpush2.bf16.msra.mxu0 0
        %2086 = vmatprep.subr.bf16.mxu0 0
        %2087 = vmatpush2.bf16.msra.mxu0 0
        %2088 = vmatprep.subr.bf16.mxu0 0
        %2089 = vmatpush2.bf16.msra.mxu0 0
        %2090 = vmatprep.subr.bf16.mxu0 0
        %2091 = vmatpush2.bf16.msra.mxu0 0
        %2092 = vmatprep.subr.bf16.mxu0 0
        %2093 = vmatpush2.bf16.msra.mxu0 0
        %2094 = vmatprep.subr.bf16.mxu0 0
        %2095 = vmatpush2.bf16.msra.mxu0 0
        %2096 = vmatprep.mubr.bf16.mxu0 0
        %2097 = vmatmul.mubr.bf16.gmra.mxu0 %v1034
        %v2098 = vpop.f32.mrf.mxu0
        %v2099 = vadd.f32 %v1204, %v2098
        %v2100 = vpop.f32.mrf.mxu0
        %v2101 = vadd.f32 %v1208, %v2100
        %v2102 = vpop.f32.mrf.mxu0
        %v2103 = vpop.f32.mrf.mxu0
        %2104 = vdwg.mxu0
        %2105 = vmatprep.subr.bf16.mxu0 %v1896
        %2106 = vmatpush1.bf16.msra.mxu0 %v1895
        %2107 = vmatprep.subr.bf16.mxu0 %v1877
        %2108 = vmatpush1.bf16.msra.mxu0 %v1876
        %2109 = vmatprep.subr.bf16.mxu0 %v1858
        %2110 = vmatpush1.bf16.msra.mxu0 %v1857
        %2111 = vmatprep.subr.bf16.mxu0 %v1839
        %2112 = vmatpush1.bf16.msra.mxu0 %v1838
        %2113 = vmatprep.subr.bf16.mxu0 %v1820
        %2114 = vmatpush1.bf16.msra.mxu0 %v1819
        %2115 = vmatprep.subr.bf16.mxu0 %v1801
        %2116 = vmatpush1.bf16.msra.mxu0 %v1800
        %2117 = vmatprep.subr.bf16.mxu0 %v1782
        %2118 = vmatpush1.bf16.msra.mxu0 %v1781
        %2119 = vmatprep.subr.bf16.mxu0 %v1763
        %2120 = vmatpush1.bf16.msra.mxu0 %v1762
        %2121 = vmatprep.subr.bf16.mxu0 0
        %2122 = vmatpush2.bf16.msra.mxu0 0
        %2123 = vmatprep.subr.bf16.mxu0 0
        %2124 = vmatpush2.bf16.msra.mxu0 0
        %2125 = vmatprep.subr.bf16.mxu0 0
        %2126 = vmatpush2.bf16.msra.mxu0 0
        %2127 = vmatprep.subr.bf16.mxu0 0
        %2128 = vmatpush2.bf16.msra.mxu0 0
        %2129 = vmatprep.subr.bf16.mxu0 0
        %2130 = vmatpush2.bf16.msra.mxu0 0
        %2131 = vmatprep.subr.bf16.mxu0 0
        %2132 = vmatpush2.bf16.msra.mxu0 0
        %2133 = vmatprep.subr.bf16.mxu0 0
        %2134 = vmatpush2.bf16.msra.mxu0 0
        %2135 = vmatprep.subr.bf16.mxu0 0
        %2136 = vmatpush2.bf16.msra.mxu0 0
        %2137 = vmatprep.mubr.bf16.mxu0 0
        %2138 = vmatmul.mubr.bf16.gmra.mxu0 %v1034
        %v2139 = vpop.f32.mrf.mxu0
        %v2140 = vadd.f32 %v1212, %v2139
        %v2141 = vpop.f32.mrf.mxu0
        %v2142 = vadd.f32 %v1216, %v2141
        %v2143 = vpop.f32.mrf.mxu0
        %v2144 = vpop.f32.mrf.mxu0
        %2145 = vdwg.mxu0
        %2146 = vmatprep.subr.bf16.mxu0 %v1898
        %2147 = vmatpush1.bf16.msra.mxu0 %v1897
        %2148 = vmatprep.subr.bf16.mxu0 %v1879
        %2149 = vmatpush1.bf16.msra.mxu0 %v1878
        %2150 = vmatprep.subr.bf16.mxu0 %v1860
        %2151 = vmatpush1.bf16.msra.mxu0 %v1859
        %2152 = vmatprep.subr.bf16.mxu0 %v1841
        %2153 = vmatpush1.bf16.msra.mxu0 %v1840
        %2154 = vmatprep.subr.bf16.mxu0 %v1822
        %2155 = vmatpush1.bf16.msra.mxu0 %v1821
        %2156 = vmatprep.subr.bf16.mxu0 %v1803
        %2157 = vmatpush1.bf16.msra.mxu0 %v1802
        %2158 = vmatprep.subr.bf16.mxu0 %v1784
        %2159 = vmatpush1.bf16.msra.mxu0 %v1783
        %2160 = vmatprep.subr.bf16.mxu0 %v1765
        %2161 = vmatpush1.bf16.msra.mxu0 %v1764
        %2162 = vmatprep.subr.bf16.mxu0 0
        %2163 = vmatpush2.bf16.msra.mxu0 0
        %2164 = vmatprep.subr.bf16.mxu0 0
        %2165 = vmatpush2.bf16.msra.mxu0 0
        %2166 = vmatprep.subr.bf16.mxu0 0
        %2167 = vmatpush2.bf16.msra.mxu0 0
        %2168 = vmatprep.subr.bf16.mxu0 0
        %2169 = vmatpush2.bf16.msra.mxu0 0
        %2170 = vmatprep.subr.bf16.mxu0 0
        %2171 = vmatpush2.bf16.msra.mxu0 0
        %2172 = vmatprep.subr.bf16.mxu0 0
        %2173 = vmatpush2.bf16.msra.mxu0 0
        %2174 = vmatprep.subr.bf16.mxu0 0
        %2175 = vmatpush2.bf16.msra.mxu0 0
        %2176 = vmatprep.subr.bf16.mxu0 0
        %2177 = vmatpush2.bf16.msra.mxu0 0
        %2178 = vmatprep.mubr.bf16.mxu0 0
        %2179 = vmatmul.mubr.bf16.gmra.mxu0 %v1034
        %v2180 = vpop.f32.mrf.mxu0
        %v2181 = vadd.f32 %v1220, %v2180
        %v2182 = vpop.f32.mrf.mxu0
        %v2183 = vadd.f32 %v1224, %v2182
        %v2184 = vpop.f32.mrf.mxu0
        %v2185 = vpop.f32.mrf.mxu0
        %2186 = vdwg.mxu0
        %2187 = vmatprep.subr.bf16.mxu0 %v1900
        %2188 = vmatpush1.bf16.msra.mxu0 %v1899
        %2189 = vmatprep.subr.bf16.mxu0 %v1881
        %2190 = vmatpush1.bf16.msra.mxu0 %v1880
        %2191 = vmatprep.subr.bf16.mxu0 %v1862
        %2192 = vmatpush1.bf16.msra.mxu0 %v1861
        %2193 = vmatprep.subr.bf16.mxu0 %v1843
        %2194 = vmatpush1.bf16.msra.mxu0 %v1842
        %2195 = vmatprep.subr.bf16.mxu0 %v1824
        %2196 = vmatpush1.bf16.msra.mxu0 %v1823
        %2197 = vmatprep.subr.bf16.mxu0 %v1805
        %2198 = vmatpush1.bf16.msra.mxu0 %v1804
        %2199 = vmatprep.subr.bf16.mxu0 %v1786
        %2200 = vmatpush1.bf16.msra.mxu0 %v1785
        %2201 = vmatprep.subr.bf16.mxu0 %v1767
        %2202 = vmatpush1.bf16.msra.mxu0 %v1766
        %2203 = vmatprep.subr.bf16.mxu0 0
        %2204 = vmatpush2.bf16.msra.mxu0 0
        %2205 = vmatprep.subr.bf16.mxu0 0
        %2206 = vmatpush2.bf16.msra.mxu0 0
        %2207 = vmatprep.subr.bf16.mxu0 0
        %2208 = vmatpush2.bf16.msra.mxu0 0
        %2209 = vmatprep.subr.bf16.mxu0 0
        %2210 = vmatpush2.bf16.msra.mxu0 0
        %2211 = vmatprep.subr.bf16.mxu0 0
        %2212 = vmatpush2.bf16.msra.mxu0 0
        %2213 = vmatprep.subr.bf16.mxu0 0
        %2214 = vmatpush2.bf16.msra.mxu0 0
        %2215 = vmatprep.subr.bf16.mxu0 0
        %2216 = vmatpush2.bf16.msra.mxu0 0
        %2217 = vmatprep.subr.bf16.mxu0 0
        %2218 = vmatpush2.bf16.msra.mxu0 0
        %2219 = vmatprep.mubr.bf16.mxu0 0
        %2220 = vmatmul.mubr.bf16.gmra.mxu0 %v1034
        %v2221 = vpop.f32.mrf.mxu0
        %v2222 = vadd.f32 %v1228, %v2221
        %v2223 = vpop.f32.mrf.mxu0
        %v2224 = vadd.f32 %v1232, %v2223
        %v2225 = vpop.f32.mrf.mxu0
        %v2226 = vpop.f32.mrf.mxu0
        %2227 = vdwg.mxu0
        %2228 = vmatprep.subr.bf16.mxu0 %v1902
        %2229 = vmatpush1.bf16.msra.mxu0 %v1901
        %2230 = vmatprep.subr.bf16.mxu0 %v1883
        %2231 = vmatpush1.bf16.msra.mxu0 %v1882
        %2232 = vmatprep.subr.bf16.mxu0 %v1864
        %2233 = vmatpush1.bf16.msra.mxu0 %v1863
        %2234 = vmatprep.subr.bf16.mxu0 %v1845
        %2235 = vmatpush1.bf16.msra.mxu0 %v1844
        %2236 = vmatprep.subr.bf16.mxu0 %v1826
        %2237 = vmatpush1.bf16.msra.mxu0 %v1825
        %2238 = vmatprep.subr.bf16.mxu0 %v1807
        %2239 = vmatpush1.bf16.msra.mxu0 %v1806
        %2240 = vmatprep.subr.bf16.mxu0 %v1788
        %2241 = vmatpush1.bf16.msra.mxu0 %v1787
        %2242 = vmatprep.subr.bf16.mxu0 %v1769
        %2243 = vmatpush1.bf16.msra.mxu0 %v1768
        %2244 = vmatprep.subr.bf16.mxu0 0
        %2245 = vmatpush2.bf16.msra.mxu0 0
        %2246 = vmatprep.subr.bf16.mxu0 0
        %2247 = vmatpush2.bf16.msra.mxu0 0
        %2248 = vmatprep.subr.bf16.mxu0 0
        %2249 = vmatpush2.bf16.msra.mxu0 0
        %2250 = vmatprep.subr.bf16.mxu0 0
        %2251 = vmatpush2.bf16.msra.mxu0 0
        %2252 = vmatprep.subr.bf16.mxu0 0
        %2253 = vmatpush2.bf16.msra.mxu0 0
        %2254 = vmatprep.subr.bf16.mxu0 0
        %2255 = vmatpush2.bf16.msra.mxu0 0
        %2256 = vmatprep.subr.bf16.mxu0 0
        %2257 = vmatpush2.bf16.msra.mxu0 0
        %2258 = vmatprep.subr.bf16.mxu0 0
        %2259 = vmatpush2.bf16.msra.mxu0 0
        %2260 = vmatprep.mubr.bf16.mxu0 0
        %2261 = vmatmul.mubr.bf16.gmra.mxu0 %v1034
        %v2262 = vpop.f32.mrf.mxu0
        %v2263 = vadd.f32 %v1236, %v2262
        %v2264 = vpop.f32.mrf.mxu0
        %v2265 = vadd.f32 %v1240, %v2264
        %v2266 = vpop.f32.mrf.mxu0
        %v2267 = vpop.f32.mrf.mxu0
        %2268 = vdwg.mxu0
        %2269 = vmatprep.subr.bf16.mxu0 %v1904
        %2270 = vmatpush1.bf16.msra.mxu0 %v1903
        %2271 = vmatprep.subr.bf16.mxu0 %v1885
        %2272 = vmatpush1.bf16.msra.mxu0 %v1884
        %2273 = vmatprep.subr.bf16.mxu0 %v1866
        %2274 = vmatpush1.bf16.msra.mxu0 %v1865
        %2275 = vmatprep.subr.bf16.mxu0 %v1847
        %2276 = vmatpush1.bf16.msra.mxu0 %v1846
        %2277 = vmatprep.subr.bf16.mxu0 %v1828
        %2278 = vmatpush1.bf16.msra.mxu0 %v1827
        %2279 = vmatprep.subr.bf16.mxu0 %v1809
        %2280 = vmatpush1.bf16.msra.mxu0 %v1808
        %2281 = vmatprep.subr.bf16.mxu0 %v1790
        %2282 = vmatpush1.bf16.msra.mxu0 %v1789
        %2283 = vmatprep.subr.bf16.mxu0 %v1771
        %2284 = vmatpush1.bf16.msra.mxu0 %v1770
        %2285 = vmatprep.subr.bf16.mxu0 0
        %2286 = vmatpush2.bf16.msra.mxu0 0
        %2287 = vmatprep.subr.bf16.mxu0 0
        %2288 = vmatpush2.bf16.msra.mxu0 0
        %2289 = vmatprep.subr.bf16.mxu0 0
        %2290 = vmatpush2.bf16.msra.mxu0 0
        %2291 = vmatprep.subr.bf16.mxu0 0
        %2292 = vmatpush2.bf16.msra.mxu0 0
        %2293 = vmatprep.subr.bf16.mxu0 0
        %2294 = vmatpush2.bf16.msra.mxu0 0
        %2295 = vmatprep.subr.bf16.mxu0 0
        %2296 = vmatpush2.bf16.msra.mxu0 0
        %2297 = vmatprep.subr.bf16.mxu0 0
        %2298 = vmatpush2.bf16.msra.mxu0 0
        %2299 = vmatprep.subr.bf16.mxu0 0
        %2300 = vmatpush2.bf16.msra.mxu0 0
        %2301 = vmatprep.mubr.bf16.mxu0 0
        %2302 = vmatmul.mubr.bf16.gmra.mxu0 %v1034
        %v2303 = vpop.f32.mrf.mxu0
        %v2304 = vadd.f32 %v1244, %v2303
        %v2305 = vpop.f32.mrf.mxu0
        %v2306 = vadd.f32 %v1248, %v2305
        %v2307 = vpop.f32.mrf.mxu0
        %v2308 = vpop.f32.mrf.mxu0
        %2309 = vdwg.mxu0
        %2310 = vmatprep.subr.bf16.mxu0 %v1906
        %2311 = vmatpush1.bf16.msra.mxu0 %v1905
        %2312 = vmatprep.subr.bf16.mxu0 %v1887
        %2313 = vmatpush1.bf16.msra.mxu0 %v1886
        %2314 = vmatprep.subr.bf16.mxu0 %v1868
        %2315 = vmatpush1.bf16.msra.mxu0 %v1867
        %2316 = vmatprep.subr.bf16.mxu0 %v1849
        %2317 = vmatpush1.bf16.msra.mxu0 %v1848
        %2318 = vmatprep.subr.bf16.mxu0 %v1830
        %2319 = vmatpush1.bf16.msra.mxu0 %v1829
        %2320 = vmatprep.subr.bf16.mxu0 %v1811
        %2321 = vmatpush1.bf16.msra.mxu0 %v1810
        %2322 = vmatprep.subr.bf16.mxu0 %v1792
        %2323 = vmatpush1.bf16.msra.mxu0 %v1791
        %2324 = vmatprep.subr.bf16.mxu0 %v1773
        %2325 = vmatpush1.bf16.msra.mxu0 %v1772
        %2326 = vmatprep.subr.bf16.mxu0 0
        %2327 = vmatpush2.bf16.msra.mxu0 0
        %2328 = vmatprep.subr.bf16.mxu0 0
        %2329 = vmatpush2.bf16.msra.mxu0 0
        %2330 = vmatprep.subr.bf16.mxu0 0
        %2331 = vmatpush2.bf16.msra.mxu0 0
        %2332 = vmatprep.subr.bf16.mxu0 0
        %2333 = vmatpush2.bf16.msra.mxu0 0
        %2334 = vmatprep.subr.bf16.mxu0 0
        %2335 = vmatpush2.bf16.msra.mxu0 0
        %2336 = vmatprep.subr.bf16.mxu0 0
        %2337 = vmatpush2.bf16.msra.mxu0 0
        %2338 = vmatprep.subr.bf16.mxu0 0
        %2339 = vmatpush2.bf16.msra.mxu0 0
        %2340 = vmatprep.subr.bf16.mxu0 0
        %2341 = vmatpush2.bf16.msra.mxu0 0
        %2342 = vmatprep.mubr.bf16.mxu0 0
        %2343 = vmatmul.mubr.bf16.gmra.mxu0 %v1034
        %v2344 = vpop.f32.mrf.mxu0
        %v2345 = vadd.f32 %v1252, %v2344
        %v2346 = vpop.f32.mrf.mxu0
        %v2347 = vadd.f32 %v1256, %v2346
        %v2348 = vpop.f32.mrf.mxu0
        %v2349 = vpop.f32.mrf.mxu0
        %2350 = vdwg.mxu0
        %2351 = vmatprep.subr.bf16.mxu0 %v1908
        %2352 = vmatpush1.bf16.msra.mxu0 %v1907
        %2353 = vmatprep.subr.bf16.mxu0 %v1889
        %2354 = vmatpush1.bf16.msra.mxu0 %v1888
        %2355 = vmatprep.subr.bf16.mxu0 %v1870
        %2356 = vmatpush1.bf16.msra.mxu0 %v1869
        %2357 = vmatprep.subr.bf16.mxu0 %v1851
        %2358 = vmatpush1.bf16.msra.mxu0 %v1850
        %2359 = vmatprep.subr.bf16.mxu0 %v1832
        %2360 = vmatpush1.bf16.msra.mxu0 %v1831
        %2361 = vmatprep.subr.bf16.mxu0 %v1813
        %2362 = vmatpush1.bf16.msra.mxu0 %v1812
        %2363 = vmatprep.subr.bf16.mxu0 %v1794
        %2364 = vmatpush1.bf16.msra.mxu0 %v1793
        %2365 = vmatprep.subr.bf16.mxu0 %v1775
        %2366 = vmatpush1.bf16.msra.mxu0 %v1774
        %2367 = vmatprep.subr.bf16.mxu0 0
        %2368 = vmatpush2.bf16.msra.mxu0 0
        %2369 = vmatprep.subr.bf16.mxu0 0
        %2370 = vmatpush2.bf16.msra.mxu0 0
        %2371 = vmatprep.subr.bf16.mxu0 0
        %2372 = vmatpush2.bf16.msra.mxu0 0
        %2373 = vmatprep.subr.bf16.mxu0 0
        %2374 = vmatpush2.bf16.msra.mxu0 0
        %2375 = vmatprep.subr.bf16.mxu0 0
        %2376 = vmatpush2.bf16.msra.mxu0 0
        %2377 = vmatprep.subr.bf16.mxu0 0
        %2378 = vmatpush2.bf16.msra.mxu0 0
        %2379 = vmatprep.subr.bf16.mxu0 0
        %2380 = vmatpush2.bf16.msra.mxu0 0
        %2381 = vmatprep.subr.bf16.mxu0 0
        %2382 = vmatpush2.bf16.msra.mxu0 0
        %2383 = vmatprep.mubr.bf16.mxu0 0
        %2384 = vmatmul.mubr.bf16.gmra.mxu0 %v1034
        %v2385 = vpop.f32.mrf.mxu0
        %v2386 = vadd.f32 %v1260, %v2385
        %v2387 = vpop.f32.mrf.mxu0
        %v2388 = vadd.f32 %v1264, %v2387
        %v2389 = vpop.f32.mrf.mxu0
        %v2390 = vpop.f32.mrf.mxu0
        %2391 = vdwg.mxu0
        %2392 = vmatprep.subr.bf16.mxu0 %v1910
        %2393 = vmatpush1.bf16.msra.mxu0 %v1909
        %2394 = vmatprep.subr.bf16.mxu0 %v1891
        %2395 = vmatpush1.bf16.msra.mxu0 %v1890
        %2396 = vmatprep.subr.bf16.mxu0 %v1872
        %2397 = vmatpush1.bf16.msra.mxu0 %v1871
        %2398 = vmatprep.subr.bf16.mxu0 %v1853
        %2399 = vmatpush1.bf16.msra.mxu0 %v1852
        %2400 = vmatprep.subr.bf16.mxu0 %v1834
        %2401 = vmatpush1.bf16.msra.mxu0 %v1833
        %2402 = vmatprep.subr.bf16.mxu0 %v1815
        %2403 = vmatpush1.bf16.msra.mxu0 %v1814
        %2404 = vmatprep.subr.bf16.mxu0 %v1796
        %2405 = vmatpush1.bf16.msra.mxu0 %v1795
        %2406 = vmatprep.subr.bf16.mxu0 %v1777
        %2407 = vmatpush1.bf16.msra.mxu0 %v1776
        %2408 = vmatprep.subr.bf16.mxu0 0
        %2409 = vmatpush2.bf16.msra.mxu0 0
        %2410 = vmatprep.subr.bf16.mxu0 0
        %2411 = vmatpush2.bf16.msra.mxu0 0
        %2412 = vmatprep.subr.bf16.mxu0 0
        %2413 = vmatpush2.bf16.msra.mxu0 0
        %2414 = vmatprep.subr.bf16.mxu0 0
        %2415 = vmatpush2.bf16.msra.mxu0 0
        %2416 = vmatprep.subr.bf16.mxu0 0
        %2417 = vmatpush2.bf16.msra.mxu0 0
        %2418 = vmatprep.subr.bf16.mxu0 0
        %2419 = vmatpush2.bf16.msra.mxu0 0
        %2420 = vmatprep.subr.bf16.mxu0 0
        %2421 = vmatpush2.bf16.msra.mxu0 0
        %2422 = vmatprep.subr.bf16.mxu0 0
        %2423 = vmatpush2.bf16.msra.mxu0 0
        %2424 = vmatprep.mubr.bf16.mxu0 0
        %2425 = vmatmul.mubr.bf16.gmra.mxu0 %v1034
        %v2426 = vpop.f32.mrf.mxu0
        %v2427 = vadd.f32 %v1268, %v2426
        %v2428 = vpop.f32.mrf.mxu0
        %v2429 = vadd.f32 %v1272, %v2428
        %v2430 = vpop.f32.mrf.mxu0
        %v2431 = vpop.f32.mrf.mxu0
        %2432 = vdwg.mxu0
        %2433 = vmatprep.subr.bf16.mxu0 0
        %2434 = vmatpush1.bf16.msra.mxu0 %v1911
        %2435 = vmatprep.subr.bf16.mxu0 0
        %2436 = vmatpush1.bf16.msra.mxu0 %v1892
        %2437 = vmatprep.subr.bf16.mxu0 0
        %2438 = vmatpush1.bf16.msra.mxu0 %v1873
        %2439 = vmatprep.subr.bf16.mxu0 0
        %2440 = vmatpush1.bf16.msra.mxu0 %v1854
        %2441 = vmatprep.subr.bf16.mxu0 0
        %2442 = vmatpush1.bf16.msra.mxu0 %v1835
        %2443 = vmatprep.subr.bf16.mxu0 0
        %2444 = vmatpush1.bf16.msra.mxu0 %v1816
        %2445 = vmatprep.subr.bf16.mxu0 0
        %2446 = vmatpush1.bf16.msra.mxu0 %v1797
        %2447 = vmatprep.subr.bf16.mxu0 0
        %2448 = vmatpush1.bf16.msra.mxu0 %v1778
        %2449 = vmatprep.subr.bf16.mxu0 0
        %2450 = vmatpush2.bf16.msra.mxu0 0
        %2451 = vmatprep.subr.bf16.mxu0 0
        %2452 = vmatpush2.bf16.msra.mxu0 0
        %2453 = vmatprep.subr.bf16.mxu0 0
        %2454 = vmatpush2.bf16.msra.mxu0 0
        %2455 = vmatprep.subr.bf16.mxu0 0
        %2456 = vmatpush2.bf16.msra.mxu0 0
        %2457 = vmatprep.subr.bf16.mxu0 0
        %2458 = vmatpush2.bf16.msra.mxu0 0
        %2459 = vmatprep.subr.bf16.mxu0 0
        %2460 = vmatpush2.bf16.msra.mxu0 0
        %2461 = vmatprep.subr.bf16.mxu0 0
        %2462 = vmatpush2.bf16.msra.mxu0 0
        %2463 = vmatprep.subr.bf16.mxu0 0
        %2464 = vmatpush2.bf16.msra.mxu0 0
        %2465 = vmatprep.mubr.bf16.mxu0 0
        %2466 = vmatmul.mubr.bf16.gmra.mxu0 %v1034
        %v2467 = vpop.f32.mrf.mxu0
        %v2468 = vadd.f32 %v1276, %v2467
        %v2469 = vpop.f32.mrf.mxu0
        %v2470 = vpop.f32.mrf.mxu0
        %v2471 = vpop.f32.mrf.mxu0
        %2472 = vdwg.mxu0
        %2473 = vst [vmem:[%s317] sm:$0xff] %v2099
        %2474 = vst [vmem:[%s317 + $0x8] sm:$0xff] %v2101
        %2475 = vst [vmem:[%s317 + $0x10] sm:$0xff] %v2140
        %2476 = vst [vmem:[%s317 + $0x18] sm:$0xff] %v2142
        %2477 = vst [vmem:[%s317 + $0x20] sm:$0xff] %v2181
        %2478 = vst [vmem:[%s317 + $0x28] sm:$0xff] %v2183
        %2479 = vst [vmem:[%s317 + $0x30] sm:$0xff] %v2222
        %2480 = vst [vmem:[%s317 + $0x38] sm:$0xff] %v2224
        %2481 = vst [vmem:[%s317 + $0x40] sm:$0xff] %v2263
        %2482 = vst [vmem:[%s317 + $0x48] sm:$0xff] %v2265
        %2483 = vst [vmem:[%s317 + $0x50] sm:$0xff] %v2304
        %2484 = vst [vmem:[%s317 + $0x58] sm:$0xff] %v2306
        %2485 = vst [vmem:[%s317 + $0x60] sm:$0xff] %v2345
        %2486 = vst [vmem:[%s317 + $0x68] sm:$0xff] %v2347
        %2487 = vst [vmem:[%s317 + $0x70] sm:$0xff] %v2386
        %2488 = vst [vmem:[%s317 + $0x78] sm:$0xff] %v2388
        %2489 = vst [vmem:[%s317 + $0x80] sm:$0xff] %v2427
        %2490 = vst [vmem:[%s317 + $0x88] sm:$0xff] %v2429
        %2491 = vst [vmem:[%s317 + $0x90] sm:$0xff] %v2468
        %s2492 = sand.u32 %s147, 1
        %s2493 = scalar_lea.sflag [#allocation4], %s2492
        %s2494 = sand.u32 %s147, 1
        %s2495 = smul.addr %s2494, 152
        %s2496 = scalar_lea.vmem [#allocation11], %s2495
        // Predicated region
        $region61: #{tpu_custom_call.1} parent=39 // pred_check
          %p2497 = pneg %p157
        $region62: #{tpu_custom_call.1} parent=39 // pred_check_branch
          %2499 = sbr.rel (%p2497) target = $region64
        $region63: #{tpu_custom_call.1} parent=39 // pred_region
          %s2500 = smul.u32 19, %s24
          %s2502 = ssub.s32 2432, 2432
          %2503 = vsyncadd %s2493, %s2502
          %s2504 = smul.addr %s2500, 128
          %s2505 = scalar_lea.hbm %s5, %s2504
          %s2507 = sshll.u32 %s2496, 4
          %s2508 = int_to_ptr.vmem [resolvable:$true] %s2507
          %2510 = dma.vmem_to_hbm [thread:$0]  %s2508, 2432, %s2505, %s2493
        $region64: #{tpu_custom_call.1} parent=39 // pred_fallthru
          _
      $region40: #{tpu_custom_call.1} parent=5 // pred_fallthru
        _
      %p2511 = scmp.le.s32.totalorder 2, %s19
      // Predicated region
      $region65: #{tpu_custom_call.1} parent=5 // pred_check
        %p2512 = pneg %p2511
      $region66: #{tpu_custom_call.1} parent=5 // pred_check_branch
        %2514 = sbr.rel (%p2512) target = $region68
      $region67: #{tpu_custom_call.1} parent=5 // pred_region
        %s2515 = ssub.s32 %s19, 2
        // Predicated region
        $region69: #{tpu_custom_call.1} parent=67 // pred_check
          %p2516 = pneg %p163
        $region70: #{tpu_custom_call.1} parent=67 // pred_check_branch
          %2518 = sbr.rel (%p2516) target = $region72
        $region71: #{tpu_custom_call.1} parent=67 // pred_region
          %s2519 = sand.u32 %s148, 1
          %s2520 = scalar_lea.sflag [#allocation4], %s2519
          %s2521 = sand.u32 %s148, 1
          %s2522 = smul.addr %s2521, 152
          %s2523 = scalar_lea.vmem [#allocation11], %s2522
          %2524 = dma.done %s2520, 2432
        $region72: #{tpu_custom_call.1} parent=67 // pred_fallthru
          _
      $region68: #{tpu_custom_call.1} parent=5 // pred_fallthru
        _
    $region6: #{tpu_custom_call.1} parent=1 // loop_footer
      %s23 = sadd.s32 1, %s19
    $region7: #{tpu_custom_call.1} parent=1 // loop_footer_branch
      %18 = sbr.rel target = $region3
    $region8: #{tpu_custom_call.1} parent=1 // loop_exit
      _
    %2525 = vsyncpa [#allocation3], 1
    %s2526 = scalar_lea.sflag [#allocation3], 1
    %2527 = vsyncpa %s2526, 1
    %2528 = vsyncpa [#allocation6], 1
    %2529 = vsyncpa [#allocation9], 1
    %s2530 = scalar_lea.sflag [#allocation9], 1
    %2531 = vsyncpa %s2530, 1
    %2532 = vsyncpa [#allocation4], 1
    %s2533 = scalar_lea.sflag [#allocation4], 1
    %2534 = vsyncpa %s2533, 1

</llo_original>
